<compile_context>
chip_gen: v5e
topology: v5e:2x2
jax: 0.10.0
libtpu: 0.0.40
codegen_flags: <defaults>
</compile_context>

<pallas_src>
import math
import functools

import jax
import jax.numpy as jnp
from jax import lax
from jax.experimental import pallas as pl
from jax.experimental.pallas import tpu as pltpu

_INV_SQRT2 = 1.0 / math.sqrt(2.0)
_VMEM_LIMIT = 48 * 1024 * 1024


def _pick_tile(dim, preferred, align):
    """Largest tile <= preferred that is a multiple of `align` and divides `dim`.
    Returns `dim` itself when it already fits, None when only padding will work."""
    if dim <= preferred:
        return dim                      # full-dim block is always legal
    t = (preferred // align) * align
    while t >= align:
        if dim % t == 0:
            return t
        t -= align
    return None


def _tile_or_pad(dim, preferred, align):
    """(tile, padded_dim): pad to a tile multiple when no aligned divisor exists."""
    t = _pick_tile(dim, preferred, align)
    if t is None:
        t = max(align, (preferred // align) * align)
    return t, pl.cdiv(dim, t) * t


# ----------------------------- tiled linear (y = x @ W^T + b) -----------------------------
def _linear_kernel(x_ref, w_ref, b_ref, o_ref, acc_ref):
    @pl.when(pl.program_id(2) == 0)
    def _():
        acc_ref[...] = jnp.zeros_like(acc_ref)

    # Contract K of x (tm, tk) with K of w (tn, tk) directly (PyTorch weight layout,
    # no transpose relayout).  Operands arrive pre-cast to the MXU dtype.
    acc_ref[...] += lax.dot_general(
        x_ref[...], w_ref[...],
        dimension_numbers=(((1,), (1,)), ((), ())),
        preferred_element_type=jnp.float32,
    )

    @pl.when(pl.program_id(2) == pl.num_programs(2) - 1)
    def _():
        o_ref[...] = (acc_ref[...] + b_ref[...]).astype(o_ref.dtype)


def linear(x2d, w, b, *, mxu_dtype=jnp.bfloat16, out_dtype=None,
           tm=512, tn=1024, tk=1024):
    m, k = x2d.shape
    o, k2 = w.shape                     # PyTorch layout: (out_features, in_features)
    assert k == k2
    out_dtype = out_dtype if out_dtype is not None else x2d.dtype

    # Cast once in the wrapper: weight tiles are re-DMA'd grid_m times, so bf16 weights
    # halve HBM traffic and remove the per-tile VPU casts inside the kernel.
    x_c = x2d.astype(mxu_dtype)
    w_c = w.astype(mxu_dtype)
    b_c = b.astype(jnp.float32).reshape(1, o)

    tm_, mp = _tile_or_pad(m, tm, 8)
    tn_, op = _tile_or_pad(o, tn, 128)
    tk_, kp = _tile_or_pad(k, tk, 128)
    if mp != m or kp != k:
        x_c = jnp.pad(x_c, ((0, mp - m), (0, kp - k)))
    if op != o or kp != k:
        w_c = jnp.pad(w_c, ((0, op - o), (0, kp - k)))
    if op != o:
        b_c = jnp.pad(b_c, ((0, 0), (0, op - o)))

    out = pl.pallas_call(
        _linear_kernel,
        out_shape=jax.ShapeDtypeStruct((mp, op), out_dtype),
        grid=(mp // tm_, op // tn_, kp // tk_),
        in_specs=[
            pl.BlockSpec((tm_, tk_), lambda i, j, kk: (i, kk)),
            pl.BlockSpec((tn_, tk_), lambda i, j, kk: (j, kk)),
            pl.BlockSpec((1, tn_), lambda i, j, kk: (0, j)),
        ],
        out_specs=pl.BlockSpec((tm_, tn_), lambda i, j, kk: (i, j)),
        scratch_shapes=[pltpu.VMEM((tm_, tn_), jnp.float32)],
        compiler_params=pltpu.CompilerParams(
            dimension_semantics=("parallel", "parallel", "arbitrary"),
            vmem_limit_bytes=_VMEM_LIMIT),
    )(x_c, w_c, b_c)
    if mp != m or op != o:
        out = out[:m, :o]
    return out


# --------------------------------- attention core kernel ----------------------------------
def _attention_kernel(alpha_ref, qkv_ref, gp_ref, o_ref, *,
                      scale, num_heads, head_dim, mxu_dtype):
    c = num_heads * head_dim
    d = head_dim

    # Static unroll over heads; each head's (N,N) temporaries die at its o_ref store.
    for h in range(num_heads):
        lo = h * d
        q_raw = qkv_ref[0, :, lo:lo + d]                           # (N, D) slab dtype
        k_raw = qkv_ref[0, :, c + lo:c + lo + d]                   # (N, D)
        v_raw = qkv_ref[0, :, 2 * c + lo:2 * c + lo + d]           # (N, D)
        v = v_raw.astype(jnp.float32)
        gp = gp_ref[h]                                             # (M, D) mxu dtype

        # attention logits: (q * scale) @ k^T  (scale folded into q: O(N*D) not O(N^2))
        q = (q_raw.astype(jnp.float32) * scale).astype(mxu_dtype)
        attn = lax.dot_general(
            q, k_raw.astype(mxu_dtype),
            dimension_numbers=(((1,), (1,)), ((), ())),
            preferred_element_type=jnp.float32)                    # (N, N) f32

        # group weights: v @ gp^T, exact-erf GELU (torch nn.GELU default), softmax(groups)
        gw = lax.dot_general(
            v_raw.astype(mxu_dtype), gp,
            dimension_numbers=(((1,), (1,)), ((), ())),
            preferred_element_type=jnp.float32)                    # (N, M) f32
        gw = 0.5 * gw * (1.0 + lax.erf(gw * _INV_SQRT2))
        gw = jnp.exp(gw - jnp.max(gw, axis=-1, keepdims=True))
        gw = gw * pl.reciprocal(jnp.sum(gw, axis=-1, keepdims=True), approx=True)

        # token-token group affinity: gw @ gw^T (f32: softmax output)
        gw2 = lax.dot_general(
            gw, gw, dimension_numbers=(((1,), (1,)), ((), ())),
            preferred_element_type=jnp.float32)                    # (N, N)

        # modulate logits, softmax over keys with (1 - alpha) fused into the reciprocal:
        #   attn_blend = p * ((1-a)/rowsum) + a*gw2   (one fewer (N,N) VPU pass)
        s = attn * gw2
        p = jnp.exp(s - jnp.max(s, axis=-1, keepdims=True))
        rowsum = jnp.sum(p, axis=-1, keepdims=True)
        a = alpha_ref[h]                                           # sigmoid(alpha), SMEM
        attn_blend = p * ((1.0 - a) * pl.reciprocal(rowsum, approx=True)) + a * gw2

        # query-axis normalization (torch: sum(dim=2) + 1e-8) folded into v:
        # out = attn_blend @ (v / colsum) -- replaces an (N,N) multiply with an (N,D) one.
        colsum = jnp.sum(attn_blend, axis=0, keepdims=True)        # (1, N) sum over queries
        inv_q = (1.0 / (colsum + 1e-8)).T                          # (N, 1) exact divide
        v_hat = v * inv_q                                          # (N, D)

        # TODO(synk): nn.Dropout on the attention weights omitted — identity in eval mode.
        out_h = jnp.dot(attn_blend.astype(mxu_dtype), v_hat.astype(mxu_dtype),
                        preferred_element_type=jnp.float32)        # (N, D)

        # store this head's slice immediately (bounds live ranges; HBM writeback of the
        # whole lane-dense (1, N, C) block still happens once at the end of the step)
        o_ref[0, :, lo:lo + d] = out_h.astype(o_ref.dtype)


def attention_core(qkv, gp, alpha_sig, *, num_heads, head_dim, scale,
                   mxu_dtype=jnp.bfloat16, out_dtype=None):
    B, N, threeC = qkv.shape
    C = num_heads * head_dim
    M = gp.shape[1]
    out_dtype = out_dtype if out_dtype is not None else qkv.dtype
    kernel = functools.partial(_attention_kernel, scale=scale, num_heads=num_heads,
                               head_dim=head_dim, mxu_dtype=mxu_dtype)
    return pl.pallas_call(
        kernel,
        out_shape=jax.ShapeDtypeStruct((B, N, C), out_dtype),
        grid=(B,),
        in_specs=[
            # per-head sigmoid(alpha) scalars live in SMEM (no padded VMEM tile DMA)
            pl.BlockSpec(memory_space=pltpu.MemorySpace.SMEM),
            # full (N, 3C) qkv slab for this batch row (bf16 in the fast path)
            pl.BlockSpec((1, N, threeC), lambda b: (b, 0, 0)),
            # group prototypes: constant block index -> DMA'd once, then reused
            pl.BlockSpec((num_heads, M, head_dim), lambda b: (0, 0, 0)),
        ],
        out_specs=pl.BlockSpec((1, N, C), lambda b: (b, 0, 0)),
        compiler_params=pltpu.CompilerParams(
            dimension_semantics=("parallel",),
            vmem_limit_bytes=_VMEM_LIMIT),
    )(alpha_sig, qkv, gp)


# ---------------------------------------- module ------------------------------------------
def init_params(key, dim, num_heads, gp_num):
    ks = jax.random.split(key, 6)
    s = 1.0 / math.sqrt(dim)
    return {
        "qkv_w": jax.random.normal(ks[0], (3 * dim, dim), jnp.float32) * s,
        "qkv_b": jax.random.normal(ks[1], (3 * dim,), jnp.float32) * 0.02,
        "proj_w": jax.random.normal(ks[2], (dim, dim), jnp.float32) * s,
        "proj_b": jax.random.normal(ks[3], (dim,), jnp.float32) * 0.02,
        "gp_w": jax.random.normal(ks[4], (gp_num, dim), jnp.float32) * s,
        "alpha": jax.random.normal(ks[5], (1, num_heads, 1, 1), jnp.float32),
    }


def multi_head_attention(x, params, num_heads, gp_num, mxu_dtype=jnp.bfloat16):
    # mxu_dtype=jnp.bfloat16 (default): bf16 MXU inputs + bf16 inter-kernel slabs,
    # f32 accumulation / softmax / erf.  mxu_dtype=jnp.float32: exact f32 reference path.
    b, n, c = x.shape
    h = num_heads
    d = c // h
    assert d * h == c, "dim must be divisible by num_heads"
    scale = d ** (-0.5)

    # fused qkv projection; output stays in (B*N, 3C) layout (no head-split transposes)
    qkv = linear(x.reshape(b * n, c), params["qkv_w"], params["qkv_b"],
                 mxu_dtype=mxu_dtype, out_dtype=mxu_dtype)
    qkv = qkv.reshape(b, n, 3 * c)          # pure metadata reshape

    # gp.weight.view(num_heads, gp_num, head_dim): same flat-buffer reinterpretation
    gp = params["gp_w"].reshape(h, gp_num, d).astype(mxu_dtype)

    # tiny per-head gate: sigmoid computed once outside the kernel, passed via SMEM
    alpha_sig = jax.nn.sigmoid(params["alpha"].astype(jnp.float32)).reshape(h)

    out = attention_core(qkv, gp, alpha_sig, num_heads=h, head_dim=d, scale=scale,
                         mxu_dtype=mxu_dtype, out_dtype=mxu_dtype)   # (b, n, c) merged heads

    # output projection (back to the caller's dtype)
    out = linear(out.reshape(b * n, c), params["proj_w"], params["proj_b"],
                 mxu_dtype=mxu_dtype, out_dtype=x.dtype)
    return out.reshape(b, n, c)


# ------------------------------- pure-JAX reference (f32) ---------------------------------
def _reference_forward(x, params, num_heads, gp_num):
    b, n, c = x.shape
    h = num_heads
    d = c // h
    scale = d ** (-0.5)
    qkv = jnp.einsum('bnk,ok->bno', x, params["qkv_w"]) + params["qkv_b"]
    q, k, v = jnp.split(qkv, 3, axis=-1)
    def heads(t):
        return t.reshape(b, n, h, d).transpose(0, 2, 1, 3)
    q, k, v = heads(q), heads(k), heads(v)
    attn = jnp.einsum('bhqd,bhkd->bhqk', q, k) * scale
    gp = params["gp_w"].reshape(h, gp_num, d)
    gw = jnp.einsum('bhnd,hmd->bhnm', v, gp)
    gw = 0.5 * gw * (1.0 + lax.erf(gw * _INV_SQRT2))            # exact-erf GELU
    gw = jax.nn.softmax(gw, axis=-1)
    gw2 = jnp.einsum('bhnm,bhkm->bhnk', gw, gw)
    attn = jax.nn.softmax(attn * gw2, axis=-1)
    a = jax.nn.sigmoid(params["alpha"])
    attn = (1.0 - a) * attn + a * gw2
    attn = attn / (attn.sum(axis=2, keepdims=True) + 1e-8)
    out = jnp.einsum('bhqk,bhkd->bhqd', attn, v)
    out = out.transpose(0, 2, 1, 3).reshape(b, n, c)
    return jnp.einsum('bnk,ok->bno', out, params["proj_w"]) + params["proj_b"]


if __name__ == "__main__":
    B, N, DIM, HEADS, GP_NUM = 2, 8, 32, 4, 8
    key = jax.random.PRNGKey(0)
    kx, kp = jax.random.split(key)
    x = jax.random.normal(kx, (B, N, DIM), jnp.float32)
    params = init_params(kp, DIM, HEADS, GP_NUM)

    ref = _reference_forward(x, params, HEADS, GP_NUM)

    # exact-parity path (f32 MXU inputs): tight check against the pure-JAX reference
    fwd_f32 = jax.jit(functools.partial(multi_head_attention, num_heads=HEADS,
                                        gp_num=GP_NUM, mxu_dtype=jnp.float32))
    out_f32 = fwd_f32(x, params)
    jax.block_until_ready(out_f32)
    assert out_f32.shape == (B, N, DIM)
    assert float(jnp.max(jnp.abs(out_f32 - ref))) < 1e-2

    # default fast path (bf16 MXU inputs / bf16 inter-kernel slabs): loose check
    fwd = jax.jit(functools.partial(multi_head_attention, num_heads=HEADS, gp_num=GP_NUM))
    out = fwd(x, params)
    jax.block_until_ready(out)
    assert out.shape == (B, N, DIM)
    assert float(jnp.max(jnp.abs(out - ref))) < 1e-1

    print("KERNEL_OK")
</pallas_src>

<mosaic_0001>
module attributes {stable_mosaic.version = 11 : i64} {
  func.func @_linear_kernel(%arg0: i32, %arg1: i32, %arg2: i32, %arg3: memref<16x32xf32, #tpu.memory_space<vmem>>, %arg4: memref<96x32xf32, #tpu.memory_space<vmem>>, %arg5: memref<1x96xf32, #tpu.memory_space<vmem>>, %arg6: memref<16x96xf32, #tpu.memory_space<vmem>>, %arg7: memref<16x96xf32, #tpu.memory_space<vmem>>) attributes {dimension_semantics = [#tpu.dimension_semantics<parallel>, #tpu.dimension_semantics<parallel>, #tpu.dimension_semantics<arbitrary>], iteration_bounds = array<i64: 1, 1, 1>, scalar_prefetch = 0 : i64, scratch_operands = 1 : i64, tpu.core_type = #tpu.core_type<tc>, window_params = [{transform_indices = @transform_0, window_bounds = array<i64: 16, 32>}, {transform_indices = @transform_1, window_bounds = array<i64: 96, 32>}, {transform_indices = @transform_2, window_bounds = array<i64: 1, 96>}, {transform_indices = @transform_3, window_bounds = array<i64: 16, 96>}]} {
    %c0_i32 = arith.constant 0 : i32
    %0 = arith.cmpi eq, %arg2, %c0_i32 : i32
    %1 = arith.extui %0 : i1 to i32
    %c0_i32_0 = arith.constant 0 : i32
    %2 = arith.cmpi ne, %1, %c0_i32_0 : i32
    scf.if %2 {
      %cst_10 = arith.constant 0.000000e+00 : f32
      %12 = vector.broadcast %cst_10 : f32 to vector<16x96xf32>
      %c0_11 = arith.constant 0 : index
      %c0_12 = arith.constant 0 : index
      %13 = vector.load %arg7[%c0_11, %c0_12] : memref<16x96xf32, #tpu.memory_space<vmem>>, vector<16x96xf32>
      tpu.vector_store %arg7[%c0_11, %c0_12], %12 {strides = array<i32>} : memref<16x96xf32, #tpu.memory_space<vmem>>, vector<16x96xf32>,
    } else {
    }
    %c0 = arith.constant 0 : index
    %c0_1 = arith.constant 0 : index
    %3 = vector.load %arg7[%c0, %c0_1] : memref<16x96xf32, #tpu.memory_space<vmem>>, vector<16x96xf32>
    %c0_2 = arith.constant 0 : index
    %c0_3 = arith.constant 0 : index
    %4 = vector.load %arg3[%c0_2, %c0_3] : memref<16x32xf32, #tpu.memory_space<vmem>>, vector<16x32xf32>
    %c0_4 = arith.constant 0 : index
    %c0_5 = arith.constant 0 : index
    %5 = vector.load %arg4[%c0_4, %c0_5] : memref<96x32xf32, #tpu.memory_space<vmem>>, vector<96x32xf32>
    %cst = arith.constant dense<0.000000e+00> : vector<16x96xf32>
    %6 = tpu.matmul %4, %5, %cst {dimension_numbers = #tpu.dot_dimension_numbers<[1], [1], [0], [0], [0, 0, 1, 0], [], []>} : vector<16x32xf32>, vector<96x32xf32>, vector<16x96xf32> -> vector<16x96xf32>
    %7 = arith.addf %3, %6 : vector<16x96xf32>
    %c0_6 = arith.constant 0 : index
    %c0_7 = arith.constant 0 : index
    %8 = vector.load %arg7[%c0_6, %c0_7] : memref<16x96xf32, #tpu.memory_space<vmem>>, vector<16x96xf32>
    tpu.vector_store %arg7[%c0_6, %c0_7], %7 {strides = array<i32>} : memref<16x96xf32, #tpu.memory_space<vmem>>, vector<16x96xf32>,
    %c0_i32_8 = arith.constant 0 : i32
    %9 = arith.cmpi eq, %arg2, %c0_i32_8 : i32
    %10 = arith.extui %9 : i1 to i32
    %c0_i32_9 = arith.constant 0 : i32
    %11 = arith.cmpi ne, %10, %c0_i32_9 : i32
    scf.if %11 {
      %c0_10 = arith.constant 0 : index
      %c0_11 = arith.constant 0 : index
      %12 = vector.load %arg7[%c0_10, %c0_11] : memref<16x96xf32, #tpu.memory_space<vmem>>, vector<16x96xf32>
      %c0_12 = arith.constant 0 : index
      %c0_13 = arith.constant 0 : index
      %13 = vector.load %arg5[%c0_12, %c0_13] : memref<1x96xf32, #tpu.memory_space<vmem>>, vector<1x96xf32>
      %14 = vector.broadcast %13 : vector<1x96xf32> to vector<16x96xf32>
      %15 = arith.addf %12, %14 : vector<16x96xf32>
      %c0_14 = arith.constant 0 : index
      %c0_15 = arith.constant 0 : index
      %16 = vector.load %arg6[%c0_14, %c0_15] : memref<16x96xf32, #tpu.memory_space<vmem>>, vector<16x96xf32>
      tpu.vector_store %arg6[%c0_14, %c0_15], %15 {strides = array<i32>} : memref<16x96xf32, #tpu.memory_space<vmem>>, vector<16x96xf32>,
    } else {
    }
    return
  }
  func.func @transform_0(%arg0: i32, %arg1: i32, %arg2: i32) -> (i32, i32) {
    %c0_i32 = arith.constant 0 : i32
    return %arg0, %arg2 : i32, i32
  }
  func.func @transform_1(%arg0: i32, %arg1: i32, %arg2: i32) -> (i32, i32) {
    %c0_i32 = arith.constant 0 : i32
    return %arg1, %arg2 : i32, i32
  }
  func.func @transform_2(%arg0: i32, %arg1: i32, %arg2: i32) -> (i32, i32) {
    %c0_i32 = arith.constant 0 : i32
    %c0_i32_0 = arith.constant 0 : i32
    return %c0_i32, %arg1 : i32, i32
  }
  func.func @transform_3(%arg0: i32, %arg1: i32, %arg2: i32) -> (i32, i32) {
    %c0_i32 = arith.constant 0 : i32
    return %arg0, %arg1 : i32, i32
  }
}

module attributes {stable_mosaic.version = 11 : i64} {
  func.func @_linear_kernel(%arg0: i32, %arg1: i32, %arg2: i32, %arg3: memref<16x32xf32, #tpu.memory_space<vmem>>, %arg4: memref<32x32xf32, #tpu.memory_space<vmem>>, %arg5: memref<1x32xf32, #tpu.memory_space<vmem>>, %arg6: memref<16x32xf32, #tpu.memory_space<vmem>>, %arg7: memref<16x32xf32, #tpu.memory_space<vmem>>) attributes {dimension_semantics = [#tpu.dimension_semantics<parallel>, #tpu.dimension_semantics<parallel>, #tpu.dimension_semantics<arbitrary>], iteration_bounds = array<i64: 1, 1, 1>, scalar_prefetch = 0 : i64, scratch_operands = 1 : i64, tpu.core_type = #tpu.core_type<tc>, window_params = [{transform_indices = @transform_0, window_bounds = array<i64: 16, 32>}, {transform_indices = @transform_1, window_bounds = array<i64: 32, 32>}, {transform_indices = @transform_2, window_bounds = array<i64: 1, 32>}, {transform_indices = @transform_3, window_bounds = array<i64: 16, 32>}]} {
    %c0_i32 = arith.constant 0 : i32
    %0 = arith.cmpi eq, %arg2, %c0_i32 : i32
    %1 = arith.extui %0 : i1 to i32
    %c0_i32_0 = arith.constant 0 : i32
    %2 = arith.cmpi ne, %1, %c0_i32_0 : i32
    scf.if %2 {
      %cst_10 = arith.constant 0.000000e+00 : f32
      %12 = vector.broadcast %cst_10 : f32 to vector<16x32xf32>
      %c0_11 = arith.constant 0 : index
      %c0_12 = arith.constant 0 : index
      %13 = vector.load %arg7[%c0_11, %c0_12] : memref<16x32xf32, #tpu.memory_space<vmem>>, vector<16x32xf32>
      tpu.vector_store %arg7[%c0_11, %c0_12], %12 {strides = array<i32>} : memref<16x32xf32, #tpu.memory_space<vmem>>, vector<16x32xf32>,
    } else {
    }
    %c0 = arith.constant 0 : index
    %c0_1 = arith.constant 0 : index
    %3 = vector.load %arg7[%c0, %c0_1] : memref<16x32xf32, #tpu.memory_space<vmem>>, vector<16x32xf32>
    %c0_2 = arith.constant 0 : index
    %c0_3 = arith.constant 0 : index
    %4 = vector.load %arg3[%c0_2, %c0_3] : memref<16x32xf32, #tpu.memory_space<vmem>>, vector<16x32xf32>
    %c0_4 = arith.constant 0 : index
    %c0_5 = arith.constant 0 : index
    %5 = vector.load %arg4[%c0_4, %c0_5] : memref<32x32xf32, #tpu.memory_space<vmem>>, vector<32x32xf32>
    %cst = arith.constant dense<0.000000e+00> : vector<16x32xf32>
    %6 = tpu.matmul %4, %5, %cst {dimension_numbers = #tpu.dot_dimension_numbers<[1], [1], [0], [0], [0, 0, 1, 0], [], []>} : vector<16x32xf32>, vector<32x32xf32>, vector<16x32xf32> -> vector<16x32xf32>
    %7 = arith.addf %3, %6 : vector<16x32xf32>
    %c0_6 = arith.constant 0 : index
    %c0_7 = arith.constant 0 : index
    %8 = vector.load %arg7[%c0_6, %c0_7] : memref<16x32xf32, #tpu.memory_space<vmem>>, vector<16x32xf32>
    tpu.vector_store %arg7[%c0_6, %c0_7], %7 {strides = array<i32>} : memref<16x32xf32, #tpu.memory_space<vmem>>, vector<16x32xf32>,
    %c0_i32_8 = arith.constant 0 : i32
    %9 = arith.cmpi eq, %arg2, %c0_i32_8 : i32
    %10 = arith.extui %9 : i1 to i32
    %c0_i32_9 = arith.constant 0 : i32
    %11 = arith.cmpi ne, %10, %c0_i32_9 : i32
    scf.if %11 {
      %c0_10 = arith.constant 0 : index
      %c0_11 = arith.constant 0 : index
      %12 = vector.load %arg7[%c0_10, %c0_11] : memref<16x32xf32, #tpu.memory_space<vmem>>, vector<16x32xf32>
      %c0_12 = arith.constant 0 : index
      %c0_13 = arith.constant 0 : index
      %13 = vector.load %arg5[%c0_12, %c0_13] : memref<1x32xf32, #tpu.memory_space<vmem>>, vector<1x32xf32>
      %14 = vector.broadcast %13 : vector<1x32xf32> to vector<16x32xf32>
      %15 = arith.addf %12, %14 : vector<16x32xf32>
      %c0_14 = arith.constant 0 : index
      %c0_15 = arith.constant 0 : index
      %16 = vector.load %arg6[%c0_14, %c0_15] : memref<16x32xf32, #tpu.memory_space<vmem>>, vector<16x32xf32>
      tpu.vector_store %arg6[%c0_14, %c0_15], %15 {strides = array<i32>} : memref<16x32xf32, #tpu.memory_space<vmem>>, vector<16x32xf32>,
    } else {
    }
    return
  }
  func.func @transform_0(%arg0: i32, %arg1: i32, %arg2: i32) -> (i32, i32) {
    %c0_i32 = arith.constant 0 : i32
    return %arg0, %arg2 : i32, i32
  }
  func.func @transform_1(%arg0: i32, %arg1: i32, %arg2: i32) -> (i32, i32) {
    %c0_i32 = arith.constant 0 : i32
    return %arg1, %arg2 : i32, i32
  }
  func.func @transform_2(%arg0: i32, %arg1: i32, %arg2: i32) -> (i32, i32) {
    %c0_i32 = arith.constant 0 : i32
    %c0_i32_0 = arith.constant 0 : i32
    return %c0_i32, %arg1 : i32, i32
  }
  func.func @transform_3(%arg0: i32, %arg1: i32, %arg2: i32) -> (i32, i32) {
    %c0_i32 = arith.constant 0 : i32
    return %arg0, %arg1 : i32, i32
  }
}

module attributes {stable_mosaic.version = 11 : i64} {
  func.func @_attention_kernel(%arg0: i32, %arg1: memref<4xf32, #tpu.memory_space<smem>>, %arg2: memref<1x8x96xf32, #tpu.memory_space<vmem>>, %arg3: memref<4x8x8xf32, #tpu.memory_space<vmem>>, %arg4: memref<1x8x32xf32, #tpu.memory_space<vmem>>) attributes {dimension_semantics = [#tpu.dimension_semantics<parallel>], iteration_bounds = array<i64: 2>, scalar_prefetch = 0 : i64, scratch_operands = 0 : i64, tpu.core_type = #tpu.core_type<tc>, window_params = [{transform_indices = @transform_0, window_bounds = array<i64: 4>}, {transform_indices = @transform_1, window_bounds = array<i64: 1, 8, 96>}, {pipeline_mode = #tpu.pipeline_mode<synchronous>, transform_indices = @transform_2, window_bounds = array<i64: 4, 8, 8>}, {transform_indices = @transform_3, window_bounds = array<i64: 1, 8, 32>}]} {
    %c0 = arith.constant 0 : index
    %c0_0 = arith.constant 0 : index
    %c0_1 = arith.constant 0 : index
    %0 = vector.load %arg2[%c0, %c0_0, %c0_1] : memref<1x8x96xf32, #tpu.memory_space<vmem>>, vector<1x8x8xf32>
    %1 = vector.shape_cast %0 : vector<1x8x8xf32> to vector<8x8xf32>
    %c0_2 = arith.constant 0 : index
    %c0_3 = arith.constant 0 : index
    %c32 = arith.constant 32 : index
    %2 = vector.load %arg2[%c0_2, %c0_3, %c32] : memref<1x8x96xf32, #tpu.memory_space<vmem>>, vector<1x8x8xf32>
    %3 = vector.shape_cast %2 : vector<1x8x8xf32> to vector<8x8xf32>
    %c0_4 = arith.constant 0 : index
    %c0_5 = arith.constant 0 : index
    %c64 = arith.constant 64 : index
    %4 = vector.load %arg2[%c0_4, %c0_5, %c64] : memref<1x8x96xf32, #tpu.memory_space<vmem>>, vector<1x8x8xf32>
    %5 = vector.shape_cast %4 : vector<1x8x8xf32> to vector<8x8xf32>
    %c0_6 = arith.constant 0 : index
    %c0_7 = arith.constant 0 : index
    %c0_8 = arith.constant 0 : index
    %6 = vector.load %arg3[%c0_6, %c0_7, %c0_8] : memref<4x8x8xf32, #tpu.memory_space<vmem>>, vector<1x8x8xf32>
    %7 = vector.shape_cast %6 : vector<1x8x8xf32> to vector<8x8xf32>
    %cst = arith.constant 0.353553385 : f32
    %8 = vector.broadcast %cst : f32 to vector<8x8xf32>
    %9 = arith.mulf %1, %8 : vector<8x8xf32>
    %cst_9 = arith.constant dense<0.000000e+00> : vector<8x8xf32>
    %10 = tpu.matmul %9, %3, %cst_9 {dimension_numbers = #tpu.dot_dimension_numbers<[1], [1], [0], [0], [0, 0, 1, 0], [], []>} : vector<8x8xf32>, vector<8x8xf32>, vector<8x8xf32> -> vector<8x8xf32>
    %cst_10 = arith.constant dense<0.000000e+00> : vector<8x8xf32>
    %11 = tpu.matmul %5, %7, %cst_10 {dimension_numbers = #tpu.dot_dimension_numbers<[1], [1], [0], [0], [0, 0, 1, 0], [], []>} : vector<8x8xf32>, vector<8x8xf32>, vector<8x8xf32> -> vector<8x8xf32>
    %cst_11 = arith.constant 5.000000e-01 : f32
    %12 = vector.broadcast %cst_11 : f32 to vector<8x8xf32>
    %13 = arith.mulf %12, %11 : vector<8x8xf32>
    %cst_12 = arith.constant 0.707106769 : f32
    %14 = vector.broadcast %cst_12 : f32 to vector<8x8xf32>
    %15 = arith.mulf %11, %14 : vector<8x8xf32>
    %16 = math.erf %15 : vector<8x8xf32>
    %cst_13 = arith.constant 1.000000e+00 : f32
    %17 = vector.broadcast %cst_13 : f32 to vector<8x8xf32>
    %18 = arith.addf %17, %16 : vector<8x8xf32>
    %19 = arith.mulf %13, %18 : vector<8x8xf32>
    %cst_14 = arith.constant dense<0xFF800000> : vector<8xf32>
    %20 = vector.multi_reduction <maximumf>, %19, %cst_14 [1] : vector<8x8xf32> to vector<8xf32>
    %21 = vector.shape_cast %20 : vector<8xf32> to vector<8x1xf32>
    %22 = vector.broadcast %21 : vector<8x1xf32> to vector<8x8xf32>
    %23 = arith.subf %19, %22 : vector<8x8xf32>
    %24 = math.exp %23 : vector<8x8xf32>
    %cst_15 = arith.constant dense<0.000000e+00> : vector<8xf32>
    %25 = vector.multi_reduction <add>, %24, %cst_15 [1] : vector<8x8xf32> to vector<8xf32>
    %26 = vector.shape_cast %25 : vector<8xf32> to vector<8x1xf32>
    %27 = tpu.reciprocal %26 {approx = true} : vector<8x1xf32> -> vector<8x1xf32>
    %28 = vector.broadcast %27 : vector<8x1xf32> to vector<8x8xf32>
    %29 = arith.mulf %24, %28 : vector<8x8xf32>
    %cst_16 = arith.constant dense<0.000000e+00> : vector<8x8xf32>
    %30 = tpu.matmul %29, %29, %cst_16 {dimension_numbers = #tpu.dot_dimension_numbers<[1], [1], [0], [0], [0, 0, 1, 0], [], []>} : vector<8x8xf32>, vector<8x8xf32>, vector<8x8xf32> -> vector<8x8xf32>
    %31 = arith.mulf %10, %30 : vector<8x8xf32>
    %cst_17 = arith.constant dense<0xFF800000> : vector<8xf32>
    %32 = vector.multi_reduction <maximumf>, %31, %cst_17 [1] : vector<8x8xf32> to vector<8xf32>
    %33 = vector.shape_cast %32 : vector<8xf32> to vector<8x1xf32>
    %34 = vector.broadcast %33 : vector<8x1xf32> to vector<8x8xf32>
    %35 = arith.subf %31, %34 : vector<8x8xf32>
    %36 = math.exp %35 : vector<8x8xf32>
    %cst_18 = arith.constant dense<0.000000e+00> : vector<8xf32>
    %37 = vector.multi_reduction <add>, %36, %cst_18 [1] : vector<8x8xf32> to vector<8xf32>
    %38 = vector.shape_cast %37 : vector<8xf32> to vector<8x1xf32>
    %c0_19 = arith.constant 0 : index
    %39 = memref.load %arg1[%c0_19] : memref<4xf32, #tpu.memory_space<smem>>
    %cst_20 = arith.constant 1.000000e+00 : f32
    %40 = arith.subf %cst_20, %39 : f32
    %41 = tpu.reciprocal %38 {approx = true} : vector<8x1xf32> -> vector<8x1xf32>
    %42 = vector.broadcast %40 : f32 to vector<8x1xf32>
    %43 = arith.mulf %42, %41 : vector<8x1xf32>
    %44 = vector.broadcast %43 : vector<8x1xf32> to vector<8x8xf32>
    %45 = arith.mulf %36, %44 : vector<8x8xf32>
    %46 = vector.broadcast %39 : f32 to vector<8x8xf32>
    %47 = arith.mulf %46, %30 : vector<8x8xf32>
    %48 = arith.addf %45, %47 : vector<8x8xf32>
    %cst_21 = arith.constant dense<0.000000e+00> : vector<8xf32>
    %49 = vector.multi_reduction <add>, %48, %cst_21 [0] : vector<8x8xf32> to vector<8xf32>
    %50 = vector.shape_cast %49 : vector<8xf32> to vector<1x8xf32>
    %cst_22 = arith.constant 9.99999993E-9 : f32
    %51 = vector.broadcast %cst_22 : f32 to vector<1x8xf32>
    %52 = arith.addf %50, %51 : vector<1x8xf32>
    %cst_23 = arith.constant 1.000000e+00 : f32
    %53 = vector.broadcast %cst_23 : f32 to vector<1x8xf32>
    %54 = arith.divf %53, %52 : vector<1x8xf32>
    %55 = tpu.transpose %54, [1, 0] : vector<1x8xf32> -> vector<8x1xf32>
    %56 = vector.broadcast %55 : vector<8x1xf32> to vector<8x8xf32>
    %57 = arith.mulf %5, %56 : vector<8x8xf32>
    %cst_24 = arith.constant dense<0.000000e+00> : vector<8x8xf32>
    %58 = tpu.matmul %48, %57, %cst_24 {dimension_numbers = #tpu.dot_dimension_numbers<[1], [0], [0], [1], [0, 0, 1, 1], [], []>} : vector<8x8xf32>, vector<8x8xf32>, vector<8x8xf32> -> vector<8x8xf32>
    %c0_25 = arith.constant 0 : index
    %c0_26 = arith.constant 0 : index
    %c0_27 = arith.constant 0 : index
    %59 = vector.load %arg4[%c0_25, %c0_26, %c0_27] : memref<1x8x32xf32, #tpu.memory_space<vmem>>, vector<1x8x8xf32>
    %60 = vector.shape_cast %59 : vector<1x8x8xf32> to vector<8x8xf32>
    %61 = vector.shape_cast %58 : vector<8x8xf32> to vector<1x8x8xf32>
    tpu.vector_store %arg4[%c0_25, %c0_26, %c0_27], %61 {strides = array<i32>} : memref<1x8x32xf32, #tpu.memory_space<vmem>>, vector<1x8x8xf32>,
    %c0_28 = arith.constant 0 : index
    %c0_29 = arith.constant 0 : index
    %c8 = arith.constant 8 : index
    %62 = vector.load %arg2[%c0_28, %c0_29, %c8] : memref<1x8x96xf32, #tpu.memory_space<vmem>>, vector<1x8x8xf32>
    %63 = vector.shape_cast %62 : vector<1x8x8xf32> to vector<8x8xf32>
    %c0_30 = arith.constant 0 : index
    %c0_31 = arith.constant 0 : index
    %c40 = arith.constant 40 : index
    %64 = vector.load %arg2[%c0_30, %c0_31, %c40] : memref<1x8x96xf32, #tpu.memory_space<vmem>>, vector<1x8x8xf32>
    %65 = vector.shape_cast %64 : vector<1x8x8xf32> to vector<8x8xf32>
    %c0_32 = arith.constant 0 : index
    %c0_33 = arith.constant 0 : index
    %c72 = arith.constant 72 : index
    %66 = vector.load %arg2[%c0_32, %c0_33, %c72] : memref<1x8x96xf32, #tpu.memory_space<vmem>>, vector<1x8x8xf32>
    %67 = vector.shape_cast %66 : vector<1x8x8xf32> to vector<8x8xf32>
    %c1 = arith.constant 1 : index
    %c0_34 = arith.constant 0 : index
    %c0_35 = arith.constant 0 : index
    %68 = vector.load %arg3[%c1, %c0_34, %c0_35] : memref<4x8x8xf32, #tpu.memory_space<vmem>>, vector<1x8x8xf32>
    %69 = vector.shape_cast %68 : vector<1x8x8xf32> to vector<8x8xf32>
    %cst_36 = arith.constant 0.353553385 : f32
    %70 = vector.broadcast %cst_36 : f32 to vector<8x8xf32>
    %71 = arith.mulf %63, %70 : vector<8x8xf32>
    %cst_37 = arith.constant dense<0.000000e+00> : vector<8x8xf32>
    %72 = tpu.matmul %71, %65, %cst_37 {dimension_numbers = #tpu.dot_dimension_numbers<[1], [1], [0], [0], [0, 0, 1, 0], [], []>} : vector<8x8xf32>, vector<8x8xf32>, vector<8x8xf32> -> vector<8x8xf32>
    %cst_38 = arith.constant dense<0.000000e+00> : vector<8x8xf32>
    %73 = tpu.matmul %67, %69, %cst_38 {dimension_numbers = #tpu.dot_dimension_numbers<[1], [1], [0], [0], [0, 0, 1, 0], [], []>} : vector<8x8xf32>, vector<8x8xf32>, vector<8x8xf32> -> vector<8x8xf32>
    %cst_39 = arith.constant 5.000000e-01 : f32
    %74 = vector.broadcast %cst_39 : f32 to vector<8x8xf32>
    %75 = arith.mulf %74, %73 : vector<8x8xf32>
    %cst_40 = arith.constant 0.707106769 : f32
    %76 = vector.broadcast %cst_40 : f32 to vector<8x8xf32>
    %77 = arith.mulf %73, %76 : vector<8x8xf32>
    %78 = math.erf %77 : vector<8x8xf32>
    %cst_41 = arith.constant 1.000000e+00 : f32
    %79 = vector.broadcast %cst_41 : f32 to vector<8x8xf32>
    %80 = arith.addf %79, %78 : vector<8x8xf32>
    %81 = arith.mulf %75, %80 : vector<8x8xf32>
    %cst_42 = arith.constant dense<0xFF800000> : vector<8xf32>
    %82 = vector.multi_reduction <maximumf>, %81, %cst_42 [1] : vector<8x8xf32> to vector<8xf32>
    %83 = vector.shape_cast %82 : vector<8xf32> to vector<8x1xf32>
    %84 = vector.broadcast %83 : vector<8x1xf32> to vector<8x8xf32>
    %85 = arith.subf %81, %84 : vector<8x8xf32>
    %86 = math.exp %85 : vector<8x8xf32>
    %cst_43 = arith.constant dense<0.000000e+00> : vector<8xf32>
    %87 = vector.multi_reduction <add>, %86, %cst_43 [1] : vector<8x8xf32> to vector<8xf32>
    %88 = vector.shape_cast %87 : vector<8xf32> to vector<8x1xf32>
    %89 = tpu.reciprocal %88 {approx = true} : vector<8x1xf32> -> vector<8x1xf32>
    %90 = vector.broadcast %89 : vector<8x1xf32> to vector<8x8xf32>
    %91 = arith.mulf %86, %90 : vector<8x8xf32>
    %cst_44 = arith.constant dense<0.000000e+00> : vector<8x8xf32>
    %92 = tpu.matmul %91, %91, %cst_44 {dimension_numbers = #tpu.dot_dimension_numbers<[1], [1], [0], [0], [0, 0, 1, 0], [], []>} : vector<8x8xf32>, vector<8x8xf32>, vector<8x8xf32> -> vector<8x8xf32>
    %93 = arith.mulf %72, %92 : vector<8x8xf32>
    %cst_45 = arith.constant dense<0xFF800000> : vector<8xf32>
    %94 = vector.multi_reduction <maximumf>, %93, %cst_45 [1] : vector<8x8xf32> to vector<8xf32>
    %95 = vector.shape_cast %94 : vector<8xf32> to vector<8x1xf32>
    %96 = vector.broadcast %95 : vector<8x1xf32> to vector<8x8xf32>
    %97 = arith.subf %93, %96 : vector<8x8xf32>
    %98 = math.exp %97 : vector<8x8xf32>
    %cst_46 = arith.constant dense<0.000000e+00> : vector<8xf32>
    %99 = vector.multi_reduction <add>, %98, %cst_46 [1] : vector<8x8xf32> to vector<8xf32>
    %100 = vector.shape_cast %99 : vector<8xf32> to vector<8x1xf32>
    %c1_47 = arith.constant 1 : index
    %101 = memref.load %arg1[%c1_47] : memref<4xf32, #tpu.memory_space<smem>>
    %cst_48 = arith.constant 1.000000e+00 : f32
    %102 = arith.subf %cst_48, %101 : f32
    %103 = tpu.reciprocal %100 {approx = true} : vector<8x1xf32> -> vector<8x1xf32>
    %104 = vector.broadcast %102 : f32 to vector<8x1xf32>
    %105 = arith.mulf %104, %103 : vector<8x1xf32>
    %106 = vector.broadcast %105 : vector<8x1xf32> to vector<8x8xf32>
    %107 = arith.mulf %98, %106 : vector<8x8xf32>
    %108 = vector.broadcast %101 : f32 to vector<8x8xf32>
    %109 = arith.mulf %108, %92 : vector<8x8xf32>
    %110 = arith.addf %107, %109 : vector<8x8xf32>
    %cst_49 = arith.constant dense<0.000000e+00> : vector<8xf32>
    %111 = vector.multi_reduction <add>, %110, %cst_49 [0] : vector<8x8xf32> to vector<8xf32>
    %112 = vector.shape_cast %111 : vector<8xf32> to vector<1x8xf32>
    %cst_50 = arith.constant 9.99999993E-9 : f32
    %113 = vector.broadcast %cst_50 : f32 to vector<1x8xf32>
    %114 = arith.addf %112, %113 : vector<1x8xf32>
    %cst_51 = arith.constant 1.000000e+00 : f32
    %115 = vector.broadcast %cst_51 : f32 to vector<1x8xf32>
    %116 = arith.divf %115, %114 : vector<1x8xf32>
    %117 = tpu.transpose %116, [1, 0] : vector<1x8xf32> -> vector<8x1xf32>
    %118 = vector.broadcast %117 : vector<8x1xf32> to vector<8x8xf32>
    %119 = arith.mulf %67, %118 : vector<8x8xf32>
    %cst_52 = arith.constant dense<0.000000e+00> : vector<8x8xf32>
    %120 = tpu.matmul %110, %119, %cst_52 {dimension_numbers = #tpu.dot_dimension_numbers<[1], [0], [0], [1], [0, 0, 1, 1], [], []>} : vector<8x8xf32>, vector<8x8xf32>, vector<8x8xf32> -> vector<8x8xf32>
    %c0_53 = arith.constant 0 : index
    %c0_54 = arith.constant 0 : index
    %c8_55 = arith.constant 8 : index
    %121 = vector.load %arg4[%c0_53, %c0_54, %c8_55] : memref<1x8x32xf32, #tpu.memory_space<vmem>>, vector<1x8x8xf32>
    %122 = vector.shape_cast %121 : vector<1x8x8xf32> to vector<8x8xf32>
    %123 = vector.shape_cast %120 : vector<8x8xf32> to vector<1x8x8xf32>
    tpu.vector_store %arg4[%c0_53, %c0_54, %c8_55], %123 {strides = array<i32>} : memref<1x8x32xf32, #tpu.memory_space<vmem>>, vector<1x8x8xf32>,
    %c0_56 = arith.constant 0 : index
    %c0_57 = arith.constant 0 : index
    %c16 = arith.constant 16 : index
    %124 = vector.load %arg2[%c0_56, %c0_57, %c16] : memref<1x8x96xf32, #tpu.memory_space<vmem>>, vector<1x8x8xf32>
    %125 = vector.shape_cast %124 : vector<1x8x8xf32> to vector<8x8xf32>
    %c0_58 = arith.constant 0 : index
    %c0_59 = arith.constant 0 : index
    %c48 = arith.constant 48 : index
    %126 = vector.load %arg2[%c0_58, %c0_59, %c48] : memref<1x8x96xf32, #tpu.memory_space<vmem>>, vector<1x8x8xf32>
    %127 = vector.shape_cast %126 : vector<1x8x8xf32> to vector<8x8xf32>
    %c0_60 = arith.constant 0 : index
    %c0_61 = arith.constant 0 : index
    %c80 = arith.constant 80 : index
    %128 = vector.load %arg2[%c0_60, %c0_61, %c80] : memref<1x8x96xf32, #tpu.memory_space<vmem>>, vector<1x8x8xf32>
    %129 = vector.shape_cast %128 : vector<1x8x8xf32> to vector<8x8xf32>
    %c2 = arith.constant 2 : index
    %c0_62 = arith.constant 0 : index
    %c0_63 = arith.constant 0 : index
    %130 = vector.load %arg3[%c2, %c0_62, %c0_63] : memref<4x8x8xf32, #tpu.memory_space<vmem>>, vector<1x8x8xf32>
    %131 = vector.shape_cast %130 : vector<1x8x8xf32> to vector<8x8xf32>
    %cst_64 = arith.constant 0.353553385 : f32
    %132 = vector.broadcast %cst_64 : f32 to vector<8x8xf32>
    %133 = arith.mulf %125, %132 : vector<8x8xf32>
    %cst_65 = arith.constant dense<0.000000e+00> : vector<8x8xf32>
    %134 = tpu.matmul %133, %127, %cst_65 {dimension_numbers = #tpu.dot_dimension_numbers<[1], [1], [0], [0], [0, 0, 1, 0], [], []>} : vector<8x8xf32>, vector<8x8xf32>, vector<8x8xf32> -> vector<8x8xf32>
    %cst_66 = arith.constant dense<0.000000e+00> : vector<8x8xf32>
    %135 = tpu.matmul %129, %131, %cst_66 {dimension_numbers = #tpu.dot_dimension_numbers<[1], [1], [0], [0], [0, 0, 1, 0], [], []>} : vector<8x8xf32>, vector<8x8xf32>, vector<8x8xf32> -> vector<8x8xf32>
    %cst_67 = arith.constant 5.000000e-01 : f32
    %136 = vector.broadcast %cst_67 : f32 to vector<8x8xf32>
    %137 = arith.mulf %136, %135 : vector<8x8xf32>
    %cst_68 = arith.constant 0.707106769 : f32
    %138 = vector.broadcast %cst_68 : f32 to vector<8x8xf32>
    %139 = arith.mulf %135, %138 : vector<8x8xf32>
    %140 = math.erf %139 : vector<8x8xf32>
    %cst_69 = arith.constant 1.000000e+00 : f32
    %141 = vector.broadcast %cst_69 : f32 to vector<8x8xf32>
    %142 = arith.addf %141, %140 : vector<8x8xf32>
    %143 = arith.mulf %137, %142 : vector<8x8xf32>
    %cst_70 = arith.constant dense<0xFF800000> : vector<8xf32>
    %144 = vector.multi_reduction <maximumf>, %143, %cst_70 [1] : vector<8x8xf32> to vector<8xf32>
    %145 = vector.shape_cast %144 : vector<8xf32> to vector<8x1xf32>
    %146 = vector.broadcast %145 : vector<8x1xf32> to vector<8x8xf32>
    %147 = arith.subf %143, %146 : vector<8x8xf32>
    %148 = math.exp %147 : vector<8x8xf32>
    %cst_71 = arith.constant dense<0.000000e+00> : vector<8xf32>
    %149 = vector.multi_reduction <add>, %148, %cst_71 [1] : vector<8x8xf32> to vector<8xf32>
    %150 = vector.shape_cast %149 : vector<8xf32> to vector<8x1xf32>
    %151 = tpu.reciprocal %150 {approx = true} : vector<8x1xf32> -> vector<8x1xf32>
    %152 = vector.broadcast %151 : vector<8x1xf32> to vector<8x8xf32>
    %153 = arith.mulf %148, %152 : vector<8x8xf32>
    %cst_72 = arith.constant dense<0.000000e+00> : vector<8x8xf32>
    %154 = tpu.matmul %153, %153, %cst_72 {dimension_numbers = #tpu.dot_dimension_numbers<[1], [1], [0], [0], [0, 0, 1, 0], [], []>} : vector<8x8xf32>, vector<8x8xf32>, vector<8x8xf32> -> vector<8x8xf32>
    %155 = arith.mulf %134, %154 : vector<8x8xf32>
    %cst_73 = arith.constant dense<0xFF800000> : vector<8xf32>
    %156 = vector.multi_reduction <maximumf>, %155, %cst_73 [1] : vector<8x8xf32> to vector<8xf32>
    %157 = vector.shape_cast %156 : vector<8xf32> to vector<8x1xf32>
    %158 = vector.broadcast %157 : vector<8x1xf32> to vector<8x8xf32>
    %159 = arith.subf %155, %158 : vector<8x8xf32>
    %160 = math.exp %159 : vector<8x8xf32>
    %cst_74 = arith.constant dense<0.000000e+00> : vector<8xf32>
    %161 = vector.multi_reduction <add>, %160, %cst_74 [1] : vector<8x8xf32> to vector<8xf32>
    %162 = vector.shape_cast %161 : vector<8xf32> to vector<8x1xf32>
    %c2_75 = arith.constant 2 : index
    %163 = memref.load %arg1[%c2_75] : memref<4xf32, #tpu.memory_space<smem>>
    %cst_76 = arith.constant 1.000000e+00 : f32
    %164 = arith.subf %cst_76, %163 : f32
    %165 = tpu.reciprocal %162 {approx = true} : vector<8x1xf32> -> vector<8x1xf32>
    %166 = vector.broadcast %164 : f32 to vector<8x1xf32>
    %167 = arith.mulf %166, %165 : vector<8x1xf32>
    %168 = vector.broadcast %167 : vector<8x1xf32> to vector<8x8xf32>
    %169 = arith.mulf %160, %168 : vector<8x8xf32>
    %170 = vector.broadcast %163 : f32 to vector<8x8xf32>
    %171 = arith.mulf %170, %154 : vector<8x8xf32>
    %172 = arith.addf %169, %171 : vector<8x8xf32>
    %cst_77 = arith.constant dense<0.000000e+00> : vector<8xf32>
    %173 = vector.multi_reduction <add>, %172, %cst_77 [0] : vector<8x8xf32> to vector<8xf32>
    %174 = vector.shape_cast %173 : vector<8xf32> to vector<1x8xf32>
    %cst_78 = arith.constant 9.99999993E-9 : f32
    %175 = vector.broadcast %cst_78 : f32 to vector<1x8xf32>
    %176 = arith.addf %174, %175 : vector<1x8xf32>
    %cst_79 = arith.constant 1.000000e+00 : f32
    %177 = vector.broadcast %cst_79 : f32 to vector<1x8xf32>
    %178 = arith.divf %177, %176 : vector<1x8xf32>
    %179 = tpu.transpose %178, [1, 0] : vector<1x8xf32> -> vector<8x1xf32>
    %180 = vector.broadcast %179 : vector<8x1xf32> to vector<8x8xf32>
    %181 = arith.mulf %129, %180 : vector<8x8xf32>
    %cst_80 = arith.constant dense<0.000000e+00> : vector<8x8xf32>
    %182 = tpu.matmul %172, %181, %cst_80 {dimension_numbers = #tpu.dot_dimension_numbers<[1], [0], [0], [1], [0, 0, 1, 1], [], []>} : vector<8x8xf32>, vector<8x8xf32>, vector<8x8xf32> -> vector<8x8xf32>
    %c0_81 = arith.constant 0 : index
    %c0_82 = arith.constant 0 : index
    %c16_83 = arith.constant 16 : index
    %183 = vector.load %arg4[%c0_81, %c0_82, %c16_83] : memref<1x8x32xf32, #tpu.memory_space<vmem>>, vector<1x8x8xf32>
    %184 = vector.shape_cast %183 : vector<1x8x8xf32> to vector<8x8xf32>
    %185 = vector.shape_cast %182 : vector<8x8xf32> to vector<1x8x8xf32>
    tpu.vector_store %arg4[%c0_81, %c0_82, %c16_83], %185 {strides = array<i32>} : memref<1x8x32xf32, #tpu.memory_space<vmem>>, vector<1x8x8xf32>,
    %c0_84 = arith.constant 0 : index
    %c0_85 = arith.constant 0 : index
    %c24 = arith.constant 24 : index
    %186 = vector.load %arg2[%c0_84, %c0_85, %c24] : memref<1x8x96xf32, #tpu.memory_space<vmem>>, vector<1x8x8xf32>
    %187 = vector.shape_cast %186 : vector<1x8x8xf32> to vector<8x8xf32>
    %c0_86 = arith.constant 0 : index
    %c0_87 = arith.constant 0 : index
    %c56 = arith.constant 56 : index
    %188 = vector.load %arg2[%c0_86, %c0_87, %c56] : memref<1x8x96xf32, #tpu.memory_space<vmem>>, vector<1x8x8xf32>
    %189 = vector.shape_cast %188 : vector<1x8x8xf32> to vector<8x8xf32>
    %c0_88 = arith.constant 0 : index
    %c0_89 = arith.constant 0 : index
    %c88 = arith.constant 88 : index
    %190 = vector.load %arg2[%c0_88, %c0_89, %c88] : memref<1x8x96xf32, #tpu.memory_space<vmem>>, vector<1x8x8xf32>
    %191 = vector.shape_cast %190 : vector<1x8x8xf32> to vector<8x8xf32>
    %c3 = arith.constant 3 : index
    %c0_90 = arith.constant 0 : index
    %c0_91 = arith.constant 0 : index
    %192 = vector.load %arg3[%c3, %c0_90, %c0_91] : memref<4x8x8xf32, #tpu.memory_space<vmem>>, vector<1x8x8xf32>
    %193 = vector.shape_cast %192 : vector<1x8x8xf32> to vector<8x8xf32>
    %cst_92 = arith.constant 0.353553385 : f32
    %194 = vector.broadcast %cst_92 : f32 to vector<8x8xf32>
    %195 = arith.mulf %187, %194 : vector<8x8xf32>
    %cst_93 = arith.constant dense<0.000000e+00> : vector<8x8xf32>
    %196 = tpu.matmul %195, %189, %cst_93 {dimension_numbers = #tpu.dot_dimension_numbers<[1], [1], [0], [0], [0, 0, 1, 0], [], []>} : vector<8x8xf32>, vector<8x8xf32>, vector<8x8xf32> -> vector<8x8xf32>
    %cst_94 = arith.constant dense<0.000000e+00> : vector<8x8xf32>
    %197 = tpu.matmul %191, %193, %cst_94 {dimension_numbers = #tpu.dot_dimension_numbers<[1], [1], [0], [0], [0, 0, 1, 0], [], []>} : vector<8x8xf32>, vector<8x8xf32>, vector<8x8xf32> -> vector<8x8xf32>
    %cst_95 = arith.constant 5.000000e-01 : f32
    %198 = vector.broadcast %cst_95 : f32 to vector<8x8xf32>
    %199 = arith.mulf %198, %197 : vector<8x8xf32>
    %cst_96 = arith.constant 0.707106769 : f32
    %200 = vector.broadcast %cst_96 : f32 to vector<8x8xf32>
    %201 = arith.mulf %197, %200 : vector<8x8xf32>
    %202 = math.erf %201 : vector<8x8xf32>
    %cst_97 = arith.constant 1.000000e+00 : f32
    %203 = vector.broadcast %cst_97 : f32 to vector<8x8xf32>
    %204 = arith.addf %203, %202 : vector<8x8xf32>
    %205 = arith.mulf %199, %204 : vector<8x8xf32>
    %cst_98 = arith.constant dense<0xFF800000> : vector<8xf32>
    %206 = vector.multi_reduction <maximumf>, %205, %cst_98 [1] : vector<8x8xf32> to vector<8xf32>
    %207 = vector.shape_cast %206 : vector<8xf32> to vector<8x1xf32>
    %208 = vector.broadcast %207 : vector<8x1xf32> to vector<8x8xf32>
    %209 = arith.subf %205, %208 : vector<8x8xf32>
    %210 = math.exp %209 : vector<8x8xf32>
    %cst_99 = arith.constant dense<0.000000e+00> : vector<8xf32>
    %211 = vector.multi_reduction <add>, %210, %cst_99 [1] : vector<8x8xf32> to vector<8xf32>
    %212 = vector.shape_cast %211 : vector<8xf32> to vector<8x1xf32>
    %213 = tpu.reciprocal %212 {approx = true} : vector<8x1xf32> -> vector<8x1xf32>
    %214 = vector.broadcast %213 : vector<8x1xf32> to vector<8x8xf32>
    %215 = arith.mulf %210, %214 : vector<8x8xf32>
    %cst_100 = arith.constant dense<0.000000e+00> : vector<8x8xf32>
    %216 = tpu.matmul %215, %215, %cst_100 {dimension_numbers = #tpu.dot_dimension_numbers<[1], [1], [0], [0], [0, 0, 1, 0], [], []>} : vector<8x8xf32>, vector<8x8xf32>, vector<8x8xf32> -> vector<8x8xf32>
    %217 = arith.mulf %196, %216 : vector<8x8xf32>
    %cst_101 = arith.constant dense<0xFF800000> : vector<8xf32>
    %218 = vector.multi_reduction <maximumf>, %217, %cst_101 [1] : vector<8x8xf32> to vector<8xf32>
    %219 = vector.shape_cast %218 : vector<8xf32> to vector<8x1xf32>
    %220 = vector.broadcast %219 : vector<8x1xf32> to vector<8x8xf32>
    %221 = arith.subf %217, %220 : vector<8x8xf32>
    %222 = math.exp %221 : vector<8x8xf32>
    %cst_102 = arith.constant dense<0.000000e+00> : vector<8xf32>
    %223 = vector.multi_reduction <add>, %222, %cst_102 [1] : vector<8x8xf32> to vector<8xf32>
    %224 = vector.shape_cast %223 : vector<8xf32> to vector<8x1xf32>
    %c3_103 = arith.constant 3 : index
    %225 = memref.load %arg1[%c3_103] : memref<4xf32, #tpu.memory_space<smem>>
    %cst_104 = arith.constant 1.000000e+00 : f32
    %226 = arith.subf %cst_104, %225 : f32
    %227 = tpu.reciprocal %224 {approx = true} : vector<8x1xf32> -> vector<8x1xf32>
    %228 = vector.broadcast %226 : f32 to vector<8x1xf32>
    %229 = arith.mulf %228, %227 : vector<8x1xf32>
    %230 = vector.broadcast %229 : vector<8x1xf32> to vector<8x8xf32>
    %231 = arith.mulf %222, %230 : vector<8x8xf32>
    %232 = vector.broadcast %225 : f32 to vector<8x8xf32>
    %233 = arith.mulf %232, %216 : vector<8x8xf32>
    %234 = arith.addf %231, %233 : vector<8x8xf32>
    %cst_105 = arith.constant dense<0.000000e+00> : vector<8xf32>
    %235 = vector.multi_reduction <add>, %234, %cst_105 [0] : vector<8x8xf32> to vector<8xf32>
    %236 = vector.shape_cast %235 : vector<8xf32> to vector<1x8xf32>
    %cst_106 = arith.constant 9.99999993E-9 : f32
    %237 = vector.broadcast %cst_106 : f32 to vector<1x8xf32>
    %238 = arith.addf %236, %237 : vector<1x8xf32>
    %cst_107 = arith.constant 1.000000e+00 : f32
    %239 = vector.broadcast %cst_107 : f32 to vector<1x8xf32>
    %240 = arith.divf %239, %238 : vector<1x8xf32>
    %241 = tpu.transpose %240, [1, 0] : vector<1x8xf32> -> vector<8x1xf32>
    %242 = vector.broadcast %241 : vector<8x1xf32> to vector<8x8xf32>
    %243 = arith.mulf %191, %242 : vector<8x8xf32>
    %cst_108 = arith.constant dense<0.000000e+00> : vector<8x8xf32>
    %244 = tpu.matmul %234, %243, %cst_108 {dimension_numbers = #tpu.dot_dimension_numbers<[1], [0], [0], [1], [0, 0, 1, 1], [], []>} : vector<8x8xf32>, vector<8x8xf32>, vector<8x8xf32> -> vector<8x8xf32>
    %c0_109 = arith.constant 0 : index
    %c0_110 = arith.constant 0 : index
    %c24_111 = arith.constant 24 : index
    %245 = vector.load %arg4[%c0_109, %c0_110, %c24_111] : memref<1x8x32xf32, #tpu.memory_space<vmem>>, vector<1x8x8xf32>
    %246 = vector.shape_cast %245 : vector<1x8x8xf32> to vector<8x8xf32>
    %247 = vector.shape_cast %244 : vector<8x8xf32> to vector<1x8x8xf32>
    tpu.vector_store %arg4[%c0_109, %c0_110, %c24_111], %247 {strides = array<i32>} : memref<1x8x32xf32, #tpu.memory_space<vmem>>, vector<1x8x8xf32>,
    return
  }
  func.func @transform_0(%arg0: i32) -> i32 {
    %c0_i32 = arith.constant 0 : i32
    %c0_i32_0 = arith.constant 0 : i32
    return %c0_i32 : i32
  }
  func.func @transform_1(%arg0: i32) -> (i32, i32, i32) {
    %c0_i32 = arith.constant 0 : i32
    %c0_i32_0 = arith.constant 0 : i32
    %c0_i32_1 = arith.constant 0 : i32
    return %arg0, %c0_i32, %c0_i32_0 : i32, i32, i32
  }
  func.func @transform_2(%arg0: i32) -> (i32, i32, i32) {
    %c0_i32 = arith.constant 0 : i32
    %c0_i32_0 = arith.constant 0 : i32
    %c0_i32_1 = arith.constant 0 : i32
    %c0_i32_2 = arith.constant 0 : i32
    return %c0_i32, %c0_i32_0, %c0_i32_1 : i32, i32, i32
  }
  func.func @transform_3(%arg0: i32) -> (i32, i32, i32) {
    %c0_i32 = arith.constant 0 : i32
    %c0_i32_0 = arith.constant 0 : i32
    %c0_i32_1 = arith.constant 0 : i32
    return %arg0, %c0_i32, %c0_i32_0 : i32, i32, i32
  }
}

</mosaic_0001>

<llo_original>
// kernel: multi_head_attention.5
$region0: #{multi_head_attention.5}
  #allocation0 [shape = 'u32[]', space=smem, size = 0x4, offset = 0x4, fixed_abs, tag = 'smem constant byte address 0x4 - core index']
  #allocation1 [shape = 'u32[72,128]{1,0:T(1,128)}', space=vmem, size = 0x9000, scoped, tag = 'internal scratch']
  #allocation2 [shape = 'f32[16,32]{1,0:T(8,128)}', space=vmem, size = 0x2000, scoped, tag = 'scratch operand']
  %s0 = inlined_call_operand.vmem [shape: f32[16,32], index: 0, kind: input, shape index: {}]
  %s1 = inlined_call_operand.vmem [shape: f32[32,32], index: 1, kind: input, shape index: {}]
  %s2 = inlined_call_operand.vmem [shape: f32[1,32], index: 2, kind: input, shape index: {}]
  %s3 = inlined_call_operand.hbm [shape: f32[16,32], index: 3, kind: output, shape index: {}]
  %s4 = sld [smem:[#allocation0]]
  $region30: #{multi_head_attention.5} parent=0
    _
  %s6 = ssub.s32 1, %s4
  %s7 = scalar_select 0, %s6, %s4
  $region1: #{multi_head_attention.5} parent=0
    #allocation3 [shape = 'u8[8192]{0}', space=vmem, size = 0x2000, scoped, tag = 'output window, operand 0, single buffered']
    #allocation4 [shape = 's32[1]{0}', space=sflag, size = 0x4, scoped, tag = 'scoped memory for multi_head_attention.5']
    %8 = vsyncpa [#allocation4], 0
    // Predicated region
    $region2: #{multi_head_attention.5} parent=1 // pred_check
      _
    $region3: #{multi_head_attention.5} parent=1 // pred_check_branch
      %10 = sbr.rel (0) target = $region5
    $region4: #{multi_head_attention.5} parent=1 // pred_region
      _
    $region5: #{multi_head_attention.5} parent=1 // pred_fallthru
      _
    // Predicated region
    $region6: #{multi_head_attention.5} parent=1 // pred_check
      _
    $region7: #{multi_head_attention.5} parent=1 // pred_check_branch
      %12 = sbr.rel (0) target = $region9
    $region8: #{multi_head_attention.5} parent=1 // pred_region
      _
    $region9: #{multi_head_attention.5} parent=1 // pred_fallthru
      _
    // Predicated region
    $region10: #{multi_head_attention.5} parent=1 // pred_check
      _
    $region11: #{multi_head_attention.5} parent=1 // pred_check_branch
      %14 = sbr.rel (0) target = $region13
    $region12: #{multi_head_attention.5} parent=1 // pred_region
      _
    $region13: #{multi_head_attention.5} parent=1 // pred_fallthru
      _
    %p15 = scmp.eq.s32.totalorder 0, 0
    // Predicated region
    $region14: #{multi_head_attention.5} parent=1 // pred_check
      %p16 = pneg %p15
    $region15: #{multi_head_attention.5} parent=1 // pred_check_branch
      %18 = sbr.rel (%p16) target = $region17
    $region16: #{multi_head_attention.5} parent=1 // pred_region
      %vm19 = vcmask 261120
      %20 = vst.msk [vmem:[#allocation2] sm:$0xff] %vm19, 0.0
      %21 = vst.msk [vmem:[#allocation2 + $0x8] sm:$0xff] %vm19, 0.0
    $region17: #{multi_head_attention.5} parent=1 // pred_fallthru
      _
    %v22 = vld [vmem:[#allocation2] sm:$0xff]
    %v23 = vld [vmem:[#allocation2 + $0x8] sm:$0xff]
    %v24 = vld [vmem:[%s0] sm:$0xff]
    %v25 = vld [vmem:[%s0 + $0x8] sm:$0xff]
    %v26 = vld [vmem:[%s1] sm:$0xff]
    %v27 = vld [vmem:[%s1 + $0x8] sm:$0xff]
    %v28 = vld [vmem:[%s1 + $0x10] sm:$0xff]
    %v29 = vld [vmem:[%s1 + $0x18] sm:$0xff]
    %vm30 = vcmask 261120
    %v32 = vsel %vm30, %v24, 0
    %v35 = vsel %vm30, %v25, 0
    %v38 = vsel %vm30, %v26, 0
    %v41 = vsel %vm30, %v27, 0
    %v44 = vsel %vm30, %v28, 0
    %v47 = vsel %vm30, %v29, 0
    %49 = vmatpush.xpose.msra.mxu0 0.0
    %50 = vmatpush.xpose.msra.mxu0 0.0
    %51 = vmatpush.xpose.msra.mxu0 0.0
    %52 = vmatpush.xpose.msra.mxu0 0.0
    %53 = vmatpush.xpose.msra.mxu0 0.0
    %54 = vmatpush.xpose.msra.mxu0 0.0
    %55 = vmatpush.xpose.msra.mxu0 0.0
    %56 = vmatpush.xpose.msra.mxu0 0.0
    %57 = vmatpush.xpose.msra.mxu0 0.0
    %58 = vmatpush.xpose.msra.mxu0 0.0
    %59 = vmatpush.xpose.msra.mxu0 0.0
    %60 = vmatpush.xpose.msra.mxu0 0.0
    %61 = vmatpush.xpose.msra.mxu0 %v47
    %62 = vmatpush.xpose.msra.mxu0 %v44
    %63 = vmatpush.xpose.msra.mxu0 %v41
    %64 = vmatpush.xpose.msra.mxu0 %v38
    %65 = vmatmul.f32.gmra.mxu0 %v32
    %v66 = vpop.f32.mrf.mxu0
    %v67 = vadd.f32 0.0, %v66
    %68 = vmatmul.f32.gmra.mxu0 %v35
    %v69 = vpop.f32.mrf.mxu0
    %v70 = vadd.f32 0.0, %v69
    %71 = vdwg.mxu0
    %v72 = vadd.f32 %v22, %v67
    %v73 = vadd.f32 %v23, %v70
    %74 = vst.msk [vmem:[#allocation2] sm:$0xff] %vm30, %v72
    %75 = vst.msk [vmem:[#allocation2 + $0x8] sm:$0xff] %vm30, %v73
    // Predicated region
    $region18: #{multi_head_attention.5} parent=1 // pred_check
      %p76 = pneg %p15
    $region19: #{multi_head_attention.5} parent=1 // pred_check_branch
      %78 = sbr.rel (%p76) target = $region21
    $region20: #{multi_head_attention.5} parent=1 // pred_region
      %v79 = vld [vmem:[#allocation2] sm:$0xff]
      %v80 = vld [vmem:[#allocation2 + $0x8] sm:$0xff]
      %v81 = vld [vmem:[%s2] sm:$0x1]
      %v83 = vperm.slane %v81, 0
      %v85 = vadd.f32 %v79, %v83
      %v86 = vadd.f32 %v80, %v83
      %87 = vst.msk [vmem:[#allocation3] sm:$0xff] %vm30, %v85
      %88 = vst.msk [vmem:[#allocation3 + $0x8] sm:$0xff] %vm30, %v86
    $region21: #{multi_head_attention.5} parent=1 // pred_fallthru
      _
    // Predicated region
    $region22: #{multi_head_attention.5} parent=1 // pred_check
      _
    $region23: #{multi_head_attention.5} parent=1 // pred_check_branch
      %90 = sbr.rel (0) target = $region25
    $region24: #{multi_head_attention.5} parent=1 // pred_region
      %92 = vsyncadd [#allocation4], 0
      %s93 = sshll.u32 [#allocation3], 4
      %s94 = int_to_ptr.vmem [resolvable:$true] %s93
      %s95 = sshll.u32 %s3, 4
      %s96 = int_to_ptr.hbm [resolvable:$true] %s95
      %101 = dma.vmem_to_hbm [thread:$0]  %s94, 256, %s96, [#allocation4], 128, 128, 8
    $region25: #{multi_head_attention.5} parent=1 // pred_fallthru
      _
    // Predicated region
    $region26: #{multi_head_attention.5} parent=1 // pred_check
      _
    $region27: #{multi_head_attention.5} parent=1 // pred_check_branch
      %103 = sbr.rel (0) target = $region29
    $region28: #{multi_head_attention.5} parent=1 // pred_region
      %105 = dma.done [#allocation4], 256
    $region29: #{multi_head_attention.5} parent=1 // pred_fallthru
      _
    %106 = vsyncpa [#allocation4], 1

// kernel: multi_head_attention.3
$region0: #{multi_head_attention.3}
  #allocation0 [shape = 'u32[]', space=smem, size = 0x4, offset = 0x4, fixed_abs, tag = 'smem constant byte address 0x4 - core index']
  #allocation1 [shape = 'u32[72,128]{1,0:T(1,128)}', space=vmem, size = 0x9000, scoped, tag = 'internal scratch']
  #allocation2 [shape = 'f32[16,96]{1,0:T(8,128)}', space=vmem, size = 0x2000, scoped, tag = 'scratch operand']
  %s0 = inlined_call_operand.vmem [shape: f32[16,32], index: 0, kind: input, shape index: {}]
  %s1 = inlined_call_operand.vmem [shape: f32[96,32], index: 1, kind: input, shape index: {}]
  %s2 = inlined_call_operand.vmem [shape: f32[1,96], index: 2, kind: input, shape index: {}]
  %s3 = inlined_call_operand.vmem [shape: f32[16,96], index: 3, kind: output, shape index: {}]
  %s4 = sld [smem:[#allocation0]]
  $region30: #{multi_head_attention.3} parent=0
    _
  %s6 = ssub.s32 1, %s4
  %s7 = scalar_select 0, %s6, %s4
  // Predicated region
  $region2: #{multi_head_attention.3} parent=0 // pred_check
    _
  $region3: #{multi_head_attention.3} parent=0 // pred_check_branch
    %9 = sbr.rel (0) target = $region5
  $region4: #{multi_head_attention.3} parent=0 // pred_region
    _
  $region5: #{multi_head_attention.3} parent=0 // pred_fallthru
    _
  // Predicated region
  $region6: #{multi_head_attention.3} parent=0 // pred_check
    _
  $region7: #{multi_head_attention.3} parent=0 // pred_check_branch
    %11 = sbr.rel (0) target = $region9
  $region8: #{multi_head_attention.3} parent=0 // pred_region
    _
  $region9: #{multi_head_attention.3} parent=0 // pred_fallthru
    _
  // Predicated region
  $region10: #{multi_head_attention.3} parent=0 // pred_check
    _
  $region11: #{multi_head_attention.3} parent=0 // pred_check_branch
    %13 = sbr.rel (0) target = $region13
  $region12: #{multi_head_attention.3} parent=0 // pred_region
    _
  $region13: #{multi_head_attention.3} parent=0 // pred_fallthru
    _
  %p14 = scmp.eq.s32.totalorder 0, 0
  // Predicated region
  $region14: #{multi_head_attention.3} parent=0 // pred_check
    %p15 = pneg %p14
  $region15: #{multi_head_attention.3} parent=0 // pred_check_branch
    %17 = sbr.rel (%p15) target = $region17
  $region16: #{multi_head_attention.3} parent=0 // pred_region
    %vm18 = vcmask 785408
    %19 = vst.msk [vmem:[#allocation2] sm:$0xff] %vm18, 0.0
    %20 = vst.msk [vmem:[#allocation2 + $0x8] sm:$0xff] %vm18, 0.0
  $region17: #{multi_head_attention.3} parent=0 // pred_fallthru
    _
  %v21 = vld [vmem:[#allocation2] sm:$0xff]
  %v22 = vld [vmem:[#allocation2 + $0x8] sm:$0xff]
  %v23 = vld [vmem:[%s0] sm:$0xff]
  %v24 = vld [vmem:[%s0 + $0x8] sm:$0xff]
  %v25 = vld [vmem:[%s1] sm:$0xff]
  %v26 = vld [vmem:[%s1 + $0x8] sm:$0xff]
  %v27 = vld [vmem:[%s1 + $0x10] sm:$0xff]
  %v28 = vld [vmem:[%s1 + $0x18] sm:$0xff]
  %v29 = vld [vmem:[%s1 + $0x20] sm:$0xff]
  %v30 = vld [vmem:[%s1 + $0x28] sm:$0xff]
  %v31 = vld [vmem:[%s1 + $0x30] sm:$0xff]
  %v32 = vld [vmem:[%s1 + $0x38] sm:$0xff]
  %v33 = vld [vmem:[%s1 + $0x40] sm:$0xff]
  %v34 = vld [vmem:[%s1 + $0x48] sm:$0xff]
  %v35 = vld [vmem:[%s1 + $0x50] sm:$0xff]
  %v36 = vld [vmem:[%s1 + $0x58] sm:$0xff]
  %vm37 = vcmask 261120
  %v39 = vsel %vm37, %v23, 0
  %v42 = vsel %vm37, %v24, 0
  %v45 = vsel %vm37, %v25, 0
  %v48 = vsel %vm37, %v26, 0
  %v51 = vsel %vm37, %v27, 0
  %v54 = vsel %vm37, %v28, 0
  %v57 = vsel %vm37, %v29, 0
  %v60 = vsel %vm37, %v30, 0
  %v63 = vsel %vm37, %v31, 0
  %v66 = vsel %vm37, %v32, 0
  %v69 = vsel %vm37, %v33, 0
  %v72 = vsel %vm37, %v34, 0
  %v75 = vsel %vm37, %v35, 0
  %v78 = vsel %vm37, %v36, 0
  %80 = vmatpush.xpose.msra.mxu0 0.0
  %81 = vmatpush.xpose.msra.mxu0 0.0
  %82 = vmatpush.xpose.msra.mxu0 0.0
  %83 = vmatpush.xpose.msra.mxu0 0.0
  %84 = vmatpush.xpose.msra.mxu0 %v78
  %85 = vmatpush.xpose.msra.mxu0 %v75
  %86 = vmatpush.xpose.msra.mxu0 %v72
  %87 = vmatpush.xpose.msra.mxu0 %v69
  %88 = vmatpush.xpose.msra.mxu0 %v66
  %89 = vmatpush.xpose.msra.mxu0 %v63
  %90 = vmatpush.xpose.msra.mxu0 %v60
  %91 = vmatpush.xpose.msra.mxu0 %v57
  %92 = vmatpush.xpose.msra.mxu0 %v54
  %93 = vmatpush.xpose.msra.mxu0 %v51
  %94 = vmatpush.xpose.msra.mxu0 %v48
  %95 = vmatpush.xpose.msra.mxu0 %v45
  %96 = vmatmul.f32.gmra.mxu0 %v39
  %v97 = vpop.f32.mrf.mxu0
  %v98 = vadd.f32 0.0, %v97
  %99 = vmatmul.f32.gmra.mxu0 %v42
  %v100 = vpop.f32.mrf.mxu0
  %v101 = vadd.f32 0.0, %v100
  %102 = vdwg.mxu0
  %v103 = vadd.f32 %v21, %v98
  %v104 = vadd.f32 %v22, %v101
  %vm105 = vcmask 785408
  %106 = vst.msk [vmem:[#allocation2] sm:$0xff] %vm105, %v103
  %107 = vst.msk [vmem:[#allocation2 + $0x8] sm:$0xff] %vm105, %v104
  // Predicated region
  $region18: #{multi_head_attention.3} parent=0 // pred_check
    %p108 = pneg %p14
  $region19: #{multi_head_attention.3} parent=0 // pred_check_branch
    %110 = sbr.rel (%p108) target = $region21
  $region20: #{multi_head_attention.3} parent=0 // pred_region
    %v111 = vld [vmem:[#allocation2] sm:$0xff]
    %v112 = vld [vmem:[#allocation2 + $0x8] sm:$0xff]
    %v113 = vld [vmem:[%s2] sm:$0x1]
    %v115 = vperm.slane %v113, 0
    %v117 = vadd.f32 %v111, %v115
    %v118 = vadd.f32 %v112, %v115
    %119 = vst.msk [vmem:[%s3] sm:$0xff] %vm105, %v117
    %120 = vst.msk [vmem:[%s3 + $0x8] sm:$0xff] %vm105, %v118
  $region21: #{multi_head_attention.3} parent=0 // pred_fallthru
    _
  // Predicated region
  $region22: #{multi_head_attention.3} parent=0 // pred_check
    _
  $region23: #{multi_head_attention.3} parent=0 // pred_check_branch
    %122 = sbr.rel (0) target = $region25
  $region24: #{multi_head_attention.3} parent=0 // pred_region
    _
  $region25: #{multi_head_attention.3} parent=0 // pred_fallthru
    _
  // Predicated region
  $region26: #{multi_head_attention.3} parent=0 // pred_check
    _
  $region27: #{multi_head_attention.3} parent=0 // pred_check_branch
    %124 = sbr.rel (0) target = $region29
  $region28: #{multi_head_attention.3} parent=0 // pred_region
    _
  $region29: #{multi_head_attention.3} parent=0 // pred_fallthru
    _

// kernel: multi_head_attention.4
$region0: #{multi_head_attention.4}
  #allocation0 [shape = 'u32[]', space=smem, size = 0x4, offset = 0x4, fixed_abs, tag = 'smem constant byte address 0x4 - core index']
  #allocation1 [shape = 'u32[72,128]{1,0:T(1,128)}', space=vmem, size = 0x9000, scoped, tag = 'internal scratch']
  %s0 = inlined_call_operand.vmem [shape: f32[4], index: 0, kind: input, shape index: {}]
  %s1 = inlined_call_operand.vmem [shape: f32[2,8,96], index: 1, kind: input, shape index: {}]
  %s2 = inlined_call_operand.vmem [shape: f32[4,8,8], index: 2, kind: input, shape index: {}]
  %s3 = inlined_call_operand.vmem [shape: f32[2,8,32], index: 3, kind: output, shape index: {}]
  %s4 = sld [smem:[#allocation0]]
  $region49: #{multi_head_attention.4} parent=0
    _
  %s6 = ssub.s32 1, %s4
  %s7 = scalar_select 0, %s6, %s4
  $region1: #{multi_head_attention.4} parent=0
    #allocation2 [shape = 'u8[512]{0}', space=smem, size = 0x200, scoped, tag = 'input window, operand 0, single buffered']
    #allocation3 [shape = 's32[2]{0}', space=sflag, size = 0x8, scoped, tag = 'scoped memory for multi_head_attention.4']
    %8 = vsyncpa [#allocation3], 0
    loop: start=0, step=1, limit=4
    $region2: #{multi_head_attention.4} parent=1 // loop_pre_header
      _
    $region3: #{multi_head_attention.4} parent=1 // loop_header
      %s10 = sphi 0, %s14
      %p11 = scmp.ge.s32.totalorder %s10, 4
      %s18 = sphi 0, %s18
      %s20 = sphi 0, %s18
      %s21 = sphi 0, %s20
      %s35 = sphi 0, %s21
      %s41 = sphi 0, %s43
      %s44 = sphi 0, %s41
      %s45 = sphi 0, %s44
      %s61 = sphi 0, %s45
      %s65 = sphi 0, %s65
      %s67 = sphi 0, %s65
      %s68 = sphi 0, %s67
      %s82 = sphi 0, %s68
      %s88 = sphi 0, %s90
      %s91 = sphi 0, %s88
      %s92 = sphi 0, %s91
      %s108 = sphi 0, %s92
    $region4: #{multi_head_attention.4} parent=1 // loop_header_branch
      %13 = sbr.rel (%p11) target = $region8
    $region5: #{multi_head_attention.4} parent=1 // loop_body
      %s15 = ssub.s32 %s10, 1
      %s16 = ssub.s32 %s10, 2
      %s17 = sadd.s32 %s10, 1
      %s19 = sadd.s32 %s18, 1
      %p22 = scmp.eq.s32.totalorder %s10, 1
      %p23 = scmp.ne.s32.totalorder %s18, %s20
      %p24 = scmp.eq.s32.totalorder %s10, 0
      %p25 = por %p23, %p24
      %p26 = scmp.ne.s32.totalorder %s18, %s20
      %p27 = scmp.eq.s32.totalorder %s15, 1
      %p28 = por %p26, %p27
      %p29 = scmp.ne.s32.totalorder %s20, %s21
      %p30 = scmp.eq.s32.totalorder %s15, 0
      %p31 = por %p29, %p30
      %p32 = scmp.ne.s32.totalorder %s20, %s21
      %p33 = scmp.eq.s32.totalorder %s16, 1
      %p34 = por %p32, %p33
      %p36 = scmp.ne.s32.totalorder %s21, %s35
      %p37 = scmp.eq.s32.totalorder %s16, 0
      %p38 = por %p36, %p37
      %s39 = ssub.s32 %s10, %s17
      %p40 = scmp.eq.s32.totalorder %s39, 0
      %s42 = sadd.s32 %s41, 1
      %s43 = scalar_select %p40, %s41, %s42
      %p46 = pneg %p40
      %p47 = scmp.eq.s32.totalorder %s10, 1
      %p48 = por %p46, %p47
      %p49 = scmp.ne.s32.totalorder %s41, %s44
      %p50 = scmp.eq.s32.totalorder %s10, 0
      %p51 = por %p49, %p50
      %p52 = scmp.ne.s32.totalorder %s41, %s44
      %p53 = scmp.eq.s32.totalorder %s15, 1
      %p54 = por %p52, %p53
      %p55 = scmp.ne.s32.totalorder %s44, %s45
      %p56 = scmp.eq.s32.totalorder %s15, 0
      %p57 = por %p55, %p56
      %p58 = scmp.ne.s32.totalorder %s44, %s45
      %p59 = scmp.eq.s32.totalorder %s16, 1
      %p60 = por %p58, %p59
      %p62 = scmp.ne.s32.totalorder %s45, %s61
      %p63 = scmp.eq.s32.totalorder %s16, 0
      %p64 = por %p62, %p63
      %s66 = sadd.s32 %s65, 1
      %p69 = scmp.eq.s32.totalorder %s10, 1
      %p70 = scmp.ne.s32.totalorder %s65, %s67
      %p71 = scmp.eq.s32.totalorder %s10, 0
      %p72 = por %p70, %p71
      %p73 = scmp.ne.s32.totalorder %s65, %s67
      %p74 = scmp.eq.s32.totalorder %s15, 1
      %p75 = por %p73, %p74
      %p76 = scmp.ne.s32.totalorder %s67, %s68
      %p77 = scmp.eq.s32.totalorder %s15, 0
      %p78 = por %p76, %p77
      %p79 = scmp.ne.s32.totalorder %s67, %s68
      %p80 = scmp.eq.s32.totalorder %s16, 1
      %p81 = por %p79, %p80
      %p83 = scmp.ne.s32.totalorder %s68, %s82
      %p84 = scmp.eq.s32.totalorder %s16, 0
      %p85 = por %p83, %p84
      %s86 = ssub.s32 %s10, %s17
      %p87 = scmp.eq.s32.totalorder %s86, 0
      %s89 = sadd.s32 %s88, 1
      %s90 = scalar_select %p87, %s88, %s89
      %p93 = pneg %p87
      %p94 = scmp.eq.s32.totalorder %s10, 1
      %p95 = por %p93, %p94
      %p96 = scmp.ne.s32.totalorder %s88, %s91
      %p97 = scmp.eq.s32.totalorder %s10, 0
      %p98 = por %p96, %p97
      %p99 = scmp.ne.s32.totalorder %s88, %s91
      %p100 = scmp.eq.s32.totalorder %s15, 1
      %p101 = por %p99, %p100
      %p102 = scmp.ne.s32.totalorder %s91, %s92
      %p103 = scmp.eq.s32.totalorder %s15, 0
      %p104 = por %p102, %p103
      %p105 = scmp.ne.s32.totalorder %s91, %s92
      %p106 = scmp.eq.s32.totalorder %s16, 1
      %p107 = por %p105, %p106
      %p109 = scmp.ne.s32.totalorder %s92, %s108
      %p110 = scmp.eq.s32.totalorder %s16, 0
      %p111 = por %p109, %p110
      %p112 = scmp.le.s32.totalorder 1, %s10
      %p113 = scmp.lt.s32.totalorder %s10, 3
      %p114 = pnand %p112, %p113
      %p115 = pneg %p114
      // Predicated region
      $region9: #{multi_head_attention.4} parent=5 // pred_check
        _
      $region10: #{multi_head_attention.4} parent=5 // pred_check_branch
        %117 = sbr.rel (%p114) target = $region12
      $region11: #{multi_head_attention.4} parent=5 // pred_region
        %s118 = ssub.s32 %s10, 1
        // Predicated region
        $region13: #{multi_head_attention.4} parent=11 // pred_check
          %p119 = pneg %p31
        $region14: #{multi_head_attention.4} parent=11 // pred_check_branch
          %121 = sbr.rel (%p119) target = $region16
        $region15: #{multi_head_attention.4} parent=11 // pred_region
          %123 = vsyncadd [#allocation3], 0
          %s125 = sshll.u32 %s0, 4
          %s126 = int_to_ptr.vmem [resolvable:$true] %s125
          %128 = dma.vmem_to_smem %s126, 16, [#allocation2], [#allocation3]
        $region16: #{multi_head_attention.4} parent=11 // pred_fallthru
          _
        // Predicated region
        $region17: #{multi_head_attention.4} parent=11 // pred_check
          %p129 = pneg %p78
        $region18: #{multi_head_attention.4} parent=11 // pred_check_branch
          %131 = sbr.rel (%p129) target = $region20
        $region19: #{multi_head_attention.4} parent=11 // pred_region
          _
        $region20: #{multi_head_attention.4} parent=11 // pred_fallthru
          _
      $region12: #{multi_head_attention.4} parent=5 // pred_fallthru
        _
      %p132 = scmp.lt.s32.totalorder %s10, 2
      // Predicated region
      $region21: #{multi_head_attention.4} parent=5 // pred_check
        %p133 = pneg %p132
      $region22: #{multi_head_attention.4} parent=5 // pred_check_branch
        %135 = sbr.rel (%p133) target = $region24
      $region23: #{multi_head_attention.4} parent=5 // pred_region
        // Predicated region
        $region25: #{multi_head_attention.4} parent=23 // pred_check
          %p136 = pneg %p51
        $region26: #{multi_head_attention.4} parent=23 // pred_check_branch
          %138 = sbr.rel (%p136) target = $region28
        $region27: #{multi_head_attention.4} parent=23 // pred_region
          %p139 = scmp.lt.s32.totalorder %s10, 1
          %s140 = scalar_select %p139, %s10, 1
          %s141 = smul.addr %s140, 8
          %s142 = scalar_lea.vmem %s1, %s141
        $region28: #{multi_head_attention.4} parent=23 // pred_fallthru
          _
      $region24: #{multi_head_attention.4} parent=5 // pred_fallthru
        _
      %p143 = scmp.le.s32.totalorder 1, %s10
      %p144 = scmp.lt.s32.totalorder %s10, 3
      %p145 = pnand %p143, %p144
      %p146 = pneg %p145
      // Predicated region
      $region29: #{multi_head_attention.4} parent=5 // pred_check
        _
      $region30: #{multi_head_attention.4} parent=5 // pred_check_branch
        %148 = sbr.rel (%p145) target = $region32
      $region31: #{multi_head_attention.4} parent=5 // pred_region
        %s149 = ssub.s32 %s10, 1
        // Predicated region
        $region33: #{multi_head_attention.4} parent=31 // pred_check
          %p150 = pneg %p31
        $region34: #{multi_head_attention.4} parent=31 // pred_check_branch
          %152 = sbr.rel (%p150) target = $region36
        $region35: #{multi_head_attention.4} parent=31 // pred_region
          %154 = dma.done [#allocation3], 16
        $region36: #{multi_head_attention.4} parent=31 // pred_fallthru
          _
        %155 = sfence
        %p156 = pneg %p31
        %p157 = pneg %p28
        %p158 = scmp.lt.s32.totalorder %s15, 1
        %s159 = scalar_select %p158, %s15, 1
        %s160 = smul.addr %s159, 8
        %s161 = scalar_lea.vmem %s1, %s160
        %p162 = pneg %p57
        %p163 = pneg %p54
        %p164 = pneg %p78
        %p165 = pneg %p75
        %p166 = pneg %p104
        %p167 = pneg %p101
        %p168 = scmp.lt.s32.totalorder %s15, 1
        %s169 = scalar_select %p168, %s15, 1
        %s170 = smul.addr %s169, 8
        %s171 = scalar_lea.vmem %s3, %s170
        %p172 = scmp.lt.s32.totalorder %s15, 1
        %s173 = scalar_select %p172, %s15, 1
        %s174 = smul.addr %s173, 8
        %s175 = scalar_lea.vmem %s1, %s174
        %p176 = scmp.lt.s32.totalorder %s15, 1
        %s177 = scalar_select %p176, %s15, 1
        %s178 = smul.addr %s177, 8
        %s179 = scalar_lea.vmem %s3, %s178
        %v180 = vld [vmem:[%s175] sm:$0xff]
        %v181 = vld [vmem:[%s2] sm:$0xff]
        %v182 = vmul.f32 %v180, 0.35355338
        %184 = vrot.lane.b32.xlu0 %v180, 96
        %v185 = vpop.permute.xlu0 %184
        %vm186 = vcmask 64512
        %v188 = vsel %vm186, %v182, 0
        %v190 = vsel %vm186, %v185, 0
        %192 = vmatpush.xpose.msra.mxu0 0.0
        %193 = vmatpush.xpose.msra.mxu0 0.0
        %194 = vmatpush.xpose.msra.mxu0 0.0
        %195 = vmatpush.xpose.msra.mxu0 0.0
        %196 = vmatpush.xpose.msra.mxu0 0.0
        %197 = vmatpush.xpose.msra.mxu0 0.0
        %198 = vmatpush.xpose.msra.mxu0 0.0
        %199 = vmatpush.xpose.msra.mxu0 0.0
        %200 = vmatpush.xpose.msra.mxu0 0.0
        %201 = vmatpush.xpose.msra.mxu0 0.0
        %202 = vmatpush.xpose.msra.mxu0 0.0
        %203 = vmatpush.xpose.msra.mxu0 0.0
        %204 = vmatpush.xpose.msra.mxu0 0.0
        %205 = vmatpush.xpose.msra.mxu0 0.0
        %206 = vmatpush.xpose.msra.mxu0 0.0
        %207 = vmatpush.xpose.msra.mxu0 %v190
        %208 = vmatmul.f32.gmra.mxu0 %v188
        %v209 = vpop.f32.mrf.mxu0
        %v210 = vadd.f32 0.0, %v209
        %211 = vdwg.mxu0
        %212 = vrot.lane.b32.xlu0 %v180, 64
        %v213 = vpop.permute.xlu0 %212
        %v214 = vsel %vm186, %v213, 0
        %v217 = vsel %vm186, %v181, 0
        %219 = vmatpush.xpose.msra.mxu0 0.0
        %220 = vmatpush.xpose.msra.mxu0 0.0
        %221 = vmatpush.xpose.msra.mxu0 0.0
        %222 = vmatpush.xpose.msra.mxu0 0.0
        %223 = vmatpush.xpose.msra.mxu0 0.0
        %224 = vmatpush.xpose.msra.mxu0 0.0
        %225 = vmatpush.xpose.msra.mxu0 0.0
        %226 = vmatpush.xpose.msra.mxu0 0.0
        %227 = vmatpush.xpose.msra.mxu0 0.0
        %228 = vmatpush.xpose.msra.mxu0 0.0
        %229 = vmatpush.xpose.msra.mxu0 0.0
        %230 = vmatpush.xpose.msra.mxu0 0.0
        %231 = vmatpush.xpose.msra.mxu0 0.0
        %232 = vmatpush.xpose.msra.mxu0 0.0
        %233 = vmatpush.xpose.msra.mxu0 0.0
        %234 = vmatpush.xpose.msra.mxu0 %v217
        %235 = vmatmul.f32.gmra.mxu0 %v214
        %v236 = vpop.f32.mrf.mxu0
        %v237 = vadd.f32 0.0, %v236
        %238 = vdwg.mxu0
        %v239 = vmul.f32 %v237, 0.5
        %v240 = vmul.f32 %v237, 0.70710677
        %v241 = vmul.f32 %v240, %v240
        %v242 = vmin.f32 16.0, %v241
        %v243 = vmul.f32 %v242, 2.1237322e-06
        %v244 = vadd.f32 %v243, 0.00028619796
        %v245 = vmul.f32 %v242, %v244
        %v246 = vadd.f32 %v245, 0.0036580483
        %v247 = vmul.f32 %v242, %v246
        %v248 = vadd.f32 %v247, 0.05243302
        %v249 = vmul.f32 %v242, %v248
        %v250 = vadd.f32 %v249, 0.18741608
        %v251 = vmul.f32 %v242, %v250
        %v252 = vadd.f32 %v251, 1.1283791
        %v253 = vmul.f32 %v240, %v252
        %v254 = vmul.f32 %v242, 3.8918573e-05
        %v255 = vadd.f32 %v254, 0.001143296
        %v256 = vmul.f32 %v242, %v255
        %v257 = vadd.f32 %v256, 0.014752088
        %v258 = vmul.f32 %v242, %v257
        %v259 = vadd.f32 %v258, 0.112945676
        %v260 = vmul.f32 %v242, %v259
        %v261 = vadd.f32 %v260, 0.4994258
        %v262 = vmul.f32 %v242, %v261
        %v263 = vadd.f32 %v262, 1.0
        %v264 = vrcp.pop %v263
        %v265 = vmul.f32 %v263, %v264
        %v266 = vsub.f32 1.0, %v265
        %v267 = vmul.f32 %v264, %v266
        %v268 = vadd.f32 %v264, %v267
        %vm269 = vweird.f32 %v263
        %vm270 = vweird.f32 %v264
        %vm271 = vmor %vm269, %vm270
        %v272 = vsel %vm271, %v264, %v268
        %v273 = vand.u32 2147483647, %v263
        %vm274 = vcmp.eq.f32.partialorder %v273, 8.507059e+37
        %v275 = vand.u32 %v263, 2147483648
        %v276 = vor.u32 1.1754944e-38, %v275
        %v277 = vsel %vm274, %v276, %v272
        %v278 = vmul.f32 %v253, %v277
        %v279 = vmin.f32 %v278, 1.0
        %v280 = vmax.f32 %v279, -1.0
        %v281 = vadd.f32 %v280, 1.0
        %v282 = vmul.f32 %v239, %v281
        %v283 = vsel %vm186, %v282, -inf
        %284 = vmax.xlane.f32.xlu0 %v283
        %v285 = vpop.xlane.xlu0 %284
        %v286 = vsub.f32 %v282, %v285
        %v287 = vmul.f32 %v286, 1.442695
        %v288 = vpow.pop %v287
        %v289 = vsel %vm186, %v288, 0.0
        %290 = vadd.xlane.f32.xlu0 %v289
        %v291 = vpop.xlane.xlu0 %290
        %v292 = vrcp.pop %v291
        %v293 = vmul.f32 %v288, %v292
        %v295 = vsel %vm186, %v293, 0
        %297 = vmatpush.xpose.msra.mxu0 0.0
        %298 = vmatpush.xpose.msra.mxu0 0.0
        %299 = vmatpush.xpose.msra.mxu0 0.0
        %300 = vmatpush.xpose.msra.mxu0 0.0
        %301 = vmatpush.xpose.msra.mxu0 0.0
        %302 = vmatpush.xpose.msra.mxu0 0.0
        %303 = vmatpush.xpose.msra.mxu0 0.0
        %304 = vmatpush.xpose.msra.mxu0 0.0
        %305 = vmatpush.xpose.msra.mxu0 0.0
        %306 = vmatpush.xpose.msra.mxu0 0.0
        %307 = vmatpush.xpose.msra.mxu0 0.0
        %308 = vmatpush.xpose.msra.mxu0 0.0
        %309 = vmatpush.xpose.msra.mxu0 0.0
        %310 = vmatpush.xpose.msra.mxu0 0.0
        %311 = vmatpush.xpose.msra.mxu0 0.0
        %312 = vmatpush.xpose.msra.mxu0 %v295
        %313 = vmatmul.f32.gmra.mxu0 %v295
        %v314 = vpop.f32.mrf.mxu0
        %v315 = vadd.f32 0.0, %v314
        %316 = vdwg.mxu0
        %v317 = vmul.f32 %v210, %v315
        %v318 = vsel %vm186, %v317, -inf
        %319 = vmax.xlane.f32.xlu0 %v318
        %v320 = vpop.xlane.xlu0 %319
        %v321 = vsub.f32 %v317, %v320
        %v322 = vmul.f32 %v321, 1.442695
        %v323 = vpow.pop %v322
        %v324 = vsel %vm186, %v323, 0.0
        %325 = vadd.xlane.f32.xlu0 %v324
        %v326 = vpop.xlane.xlu0 %325
        %s327 = sld [smem:[#allocation2]]
        %s328 = ssub.f32 1.0, %s327
        %v329 = vrcp.pop %v326
        %v330 = vstv %s328
        %v331 = vmul.f32 %v330, %v329
        %v332 = vmul.f32 %v323, %v331
        %v333 = vstv %s327
        %v334 = vmul.f32 %v333, %v315
        %v335 = vadd.f32 %v332, %v334
        %v336 = vsel %vm186, %v335, 0.0
        %v337 = vrot.slane %v336, 4
        %v338 = vadd.f32 %v336, %v337
        %v339 = vrot.slane %v338, 2
        %v340 = vadd.f32 %v338, %v339
        %v341 = vrot.slane %v340, 1
        %v342 = vadd.f32 %v340, %v341
        %v343 = vadd.f32 %v342, 1e-08
        %v344 = vrcp.pop %v343
        %v345 = vmul.f32 %v343, %v344
        %v346 = vsub.f32 1.0, %v345
        %v347 = vmul.f32 %v344, %v346
        %v348 = vadd.f32 %v344, %v347
        %vm349 = vweird.f32 %v343
        %vm350 = vweird.f32 %v344
        %vm351 = vmor %vm349, %vm350
        %v352 = vsel %vm351, %v344, %v348
        %v353 = vand.u32 2147483647, %v343
        %vm354 = vcmp.eq.f32.partialorder %v353, 8.507059e+37
        %v355 = vand.u32 %v343, 2147483648
        %v356 = vor.u32 1.1754944e-38, %v355
        %v357 = vsel %vm354, %v356, %v352
        %v358 = vmul.f32 1.0, %v357
        %359 = vxpose.xlu0.b32.start [1/16] %v358, 128
        %360 = vxpose.xlu0.b32.cont [2/16] 0.0, 128
        %361 = vxpose.xlu0.b32.cont [3/16] 0.0, 128
        %362 = vxpose.xlu0.b32.cont [4/16] 0.0, 128
        %363 = vxpose.xlu0.b32.cont [5/16] 0.0, 128
        %364 = vxpose.xlu0.b32.cont [6/16] 0.0, 128
        %365 = vxpose.xlu0.b32.cont [7/16] 0.0, 128
        %366 = vxpose.xlu0.b32.cont [8/16] 0.0, 128
        %367 = vxpose.xlu0.b32.cont [9/16] 0.0, 128
        %368 = vxpose.xlu0.b32.cont [10/16] 0.0, 128
        %369 = vxpose.xlu0.b32.cont [11/16] 0.0, 128
        %370 = vxpose.xlu0.b32.cont [12/16] 0.0, 128
        %371 = vxpose.xlu0.b32.cont [13/16] 0.0, 128
        %372 = vxpose.xlu0.b32.cont [14/16] 0.0, 128
        %373 = vxpose.xlu0.b32.cont [15/16] 0.0, 128
        %374 = vxpose.xlu0.b32.end [16/16] 0.0, 128
        %v375 = vpop.trf.xlu0
        %v376 = vpop.trf.xlu0
        %v377 = vpop.trf.xlu0
        %v378 = vpop.trf.xlu0
        %v379 = vpop.trf.xlu0
        %v380 = vpop.trf.xlu0
        %v381 = vpop.trf.xlu0
        %v382 = vpop.trf.xlu0
        %v383 = vpop.trf.xlu0
        %v384 = vpop.trf.xlu0
        %v385 = vpop.trf.xlu0
        %v386 = vpop.trf.xlu0
        %v387 = vpop.trf.xlu0
        %v388 = vpop.trf.xlu0
        %v389 = vpop.trf.xlu0
        %v390 = vpop.trf.xlu0
        %392 = vset.pattern.permute.xlu0 0
        %393 = vperm.xlu0 %392, %v375
        %v394 = vpop.permute.xlu0 %393
        %v396 = vmul.f32 %v180, %v394
        %398 = vrot.lane.b32.xlu0 %v396, 64
        %v399 = vpop.permute.xlu0 %398
        %v402 = vsel %vm186, %v335, 0
        %404 = vmatpush.msra.mxu0 0.0
        %405 = vmatpush.msra.mxu0 0.0
        %406 = vmatpush.msra.mxu0 0.0
        %407 = vmatpush.msra.mxu0 0.0
        %408 = vmatpush.msra.mxu0 0.0
        %409 = vmatpush.msra.mxu0 0.0
        %410 = vmatpush.msra.mxu0 0.0
        %411 = vmatpush.msra.mxu0 0.0
        %412 = vmatpush.msra.mxu0 0.0
        %413 = vmatpush.msra.mxu0 0.0
        %414 = vmatpush.msra.mxu0 0.0
        %415 = vmatpush.msra.mxu0 0.0
        %416 = vmatpush.msra.mxu0 0.0
        %417 = vmatpush.msra.mxu0 0.0
        %418 = vmatpush.msra.mxu0 0.0
        %419 = vmatpush.msra.mxu0 %v399
        %420 = vmatmul.f32.gmra.mxu0 %v402
        %v421 = vpop.f32.mrf.mxu0
        %v422 = vadd.f32 0.0, %v421
        %423 = vdwg.mxu0
        %424 = vst.msk [vmem:[%s179] sm:$0xff] %vm186, %v422
        %v425 = vld [vmem:[%s175] sm:$0xff]
        %s426 = scalar_lea.vmem %s2, 8
        %v427 = vld [vmem:[%s426] sm:$0xff]
        %v428 = vmul.f32 %v425, 0.35355338
        %430 = vrot.lane.b32.xlu0 %v428, 120
        %v431 = vpop.permute.xlu0 %430
        %433 = vrot.lane.b32.xlu0 %v425, 88
        %v434 = vpop.permute.xlu0 %433
        %v435 = vsel %vm186, %v431, 0
        %v437 = vsel %vm186, %v434, 0
        %439 = vmatpush.xpose.msra.mxu0 0.0
        %440 = vmatpush.xpose.msra.mxu0 0.0
        %441 = vmatpush.xpose.msra.mxu0 0.0
        %442 = vmatpush.xpose.msra.mxu0 0.0
        %443 = vmatpush.xpose.msra.mxu0 0.0
        %444 = vmatpush.xpose.msra.mxu0 0.0
        %445 = vmatpush.xpose.msra.mxu0 0.0
        %446 = vmatpush.xpose.msra.mxu0 0.0
        %447 = vmatpush.xpose.msra.mxu0 0.0
        %448 = vmatpush.xpose.msra.mxu0 0.0
        %449 = vmatpush.xpose.msra.mxu0 0.0
        %450 = vmatpush.xpose.msra.mxu0 0.0
        %451 = vmatpush.xpose.msra.mxu0 0.0
        %452 = vmatpush.xpose.msra.mxu0 0.0
        %453 = vmatpush.xpose.msra.mxu0 0.0
        %454 = vmatpush.xpose.msra.mxu0 %v437
        %455 = vmatmul.f32.gmra.mxu0 %v435
        %v456 = vpop.f32.mrf.mxu0
        %v457 = vadd.f32 0.0, %v456
        %458 = vdwg.mxu0
        %459 = vrot.lane.b32.xlu0 %v425, 56
        %v460 = vpop.permute.xlu0 %459
        %v461 = vsel %vm186, %v460, 0
        %v464 = vsel %vm186, %v427, 0
        %466 = vmatpush.xpose.msra.mxu0 0.0
        %467 = vmatpush.xpose.msra.mxu0 0.0
        %468 = vmatpush.xpose.msra.mxu0 0.0
        %469 = vmatpush.xpose.msra.mxu0 0.0
        %470 = vmatpush.xpose.msra.mxu0 0.0
        %471 = vmatpush.xpose.msra.mxu0 0.0
        %472 = vmatpush.xpose.msra.mxu0 0.0
        %473 = vmatpush.xpose.msra.mxu0 0.0
        %474 = vmatpush.xpose.msra.mxu0 0.0
        %475 = vmatpush.xpose.msra.mxu0 0.0
        %476 = vmatpush.xpose.msra.mxu0 0.0
        %477 = vmatpush.xpose.msra.mxu0 0.0
        %478 = vmatpush.xpose.msra.mxu0 0.0
        %479 = vmatpush.xpose.msra.mxu0 0.0
        %480 = vmatpush.xpose.msra.mxu0 0.0
        %481 = vmatpush.xpose.msra.mxu0 %v464
        %482 = vmatmul.f32.gmra.mxu0 %v461
        %v483 = vpop.f32.mrf.mxu0
        %v484 = vadd.f32 0.0, %v483
        %485 = vdwg.mxu0
        %v486 = vmul.f32 %v484, 0.5
        %v487 = vmul.f32 %v484, 0.70710677
        %v488 = vmul.f32 %v487, %v487
        %v489 = vmin.f32 16.0, %v488
        %v490 = vmul.f32 %v489, 2.1237322e-06
        %v491 = vadd.f32 %v490, 0.00028619796
        %v492 = vmul.f32 %v489, %v491
        %v493 = vadd.f32 %v492, 0.0036580483
        %v494 = vmul.f32 %v489, %v493
        %v495 = vadd.f32 %v494, 0.05243302
        %v496 = vmul.f32 %v489, %v495
        %v497 = vadd.f32 %v496, 0.18741608
        %v498 = vmul.f32 %v489, %v497
        %v499 = vadd.f32 %v498, 1.1283791
        %v500 = vmul.f32 %v487, %v499
        %v501 = vmul.f32 %v489, 3.8918573e-05
        %v502 = vadd.f32 %v501, 0.001143296
        %v503 = vmul.f32 %v489, %v502
        %v504 = vadd.f32 %v503, 0.014752088
        %v505 = vmul.f32 %v489, %v504
        %v506 = vadd.f32 %v505, 0.112945676
        %v507 = vmul.f32 %v489, %v506
        %v508 = vadd.f32 %v507, 0.4994258
        %v509 = vmul.f32 %v489, %v508
        %v510 = vadd.f32 %v509, 1.0
        %v511 = vrcp.pop %v510
        %v512 = vmul.f32 %v510, %v511
        %v513 = vsub.f32 1.0, %v512
        %v514 = vmul.f32 %v511, %v513
        %v515 = vadd.f32 %v511, %v514
        %vm516 = vweird.f32 %v510
        %vm517 = vweird.f32 %v511
        %vm518 = vmor %vm516, %vm517
        %v519 = vsel %vm518, %v511, %v515
        %v520 = vand.u32 2147483647, %v510
        %vm521 = vcmp.eq.f32.partialorder %v520, 8.507059e+37
        %v522 = vand.u32 %v510, 2147483648
        %v523 = vor.u32 1.1754944e-38, %v522
        %v524 = vsel %vm521, %v523, %v519
        %v525 = vmul.f32 %v500, %v524
        %v526 = vmin.f32 %v525, 1.0
        %v527 = vmax.f32 %v526, -1.0
        %v528 = vadd.f32 %v527, 1.0
        %v529 = vmul.f32 %v486, %v528
        %v530 = vsel %vm186, %v529, -inf
        %531 = vmax.xlane.f32.xlu0 %v530
        %v532 = vpop.xlane.xlu0 %531
        %v533 = vsub.f32 %v529, %v532
        %v534 = vmul.f32 %v533, 1.442695
        %v535 = vpow.pop %v534
        %v536 = vsel %vm186, %v535, 0.0
        %537 = vadd.xlane.f32.xlu0 %v536
        %v538 = vpop.xlane.xlu0 %537
        %v539 = vrcp.pop %v538
        %v540 = vmul.f32 %v535, %v539
        %v542 = vsel %vm186, %v540, 0
        %544 = vmatpush.xpose.msra.mxu0 0.0
        %545 = vmatpush.xpose.msra.mxu0 0.0
        %546 = vmatpush.xpose.msra.mxu0 0.0
        %547 = vmatpush.xpose.msra.mxu0 0.0
        %548 = vmatpush.xpose.msra.mxu0 0.0
        %549 = vmatpush.xpose.msra.mxu0 0.0
        %550 = vmatpush.xpose.msra.mxu0 0.0
        %551 = vmatpush.xpose.msra.mxu0 0.0
        %552 = vmatpush.xpose.msra.mxu0 0.0
        %553 = vmatpush.xpose.msra.mxu0 0.0
        %554 = vmatpush.xpose.msra.mxu0 0.0
        %555 = vmatpush.xpose.msra.mxu0 0.0
        %556 = vmatpush.xpose.msra.mxu0 0.0
        %557 = vmatpush.xpose.msra.mxu0 0.0
        %558 = vmatpush.xpose.msra.mxu0 0.0
        %559 = vmatpush.xpose.msra.mxu0 %v542
        %560 = vmatmul.f32.gmra.mxu0 %v542
        %v561 = vpop.f32.mrf.mxu0
        %v562 = vadd.f32 0.0, %v561
        %563 = vdwg.mxu0
        %v564 = vmul.f32 %v457, %v562
        %v565 = vsel %vm186, %v564, -inf
        %566 = vmax.xlane.f32.xlu0 %v565
        %v567 = vpop.xlane.xlu0 %566
        %v568 = vsub.f32 %v564, %v567
        %v569 = vmul.f32 %v568, 1.442695
        %v570 = vpow.pop %v569
        %v571 = vsel %vm186, %v570, 0.0
        %572 = vadd.xlane.f32.xlu0 %v571
        %v573 = vpop.xlane.xlu0 %572
        %s574 = sld [smem:[#allocation2 + $0x1]]
        %s575 = ssub.f32 1.0, %s574
        %v576 = vrcp.pop %v573
        %v577 = vstv %s575
        %v578 = vmul.f32 %v577, %v576
        %v579 = vmul.f32 %v570, %v578
        %v580 = vstv %s574
        %v581 = vmul.f32 %v580, %v562
        %v582 = vadd.f32 %v579, %v581
        %v583 = vsel %vm186, %v582, 0.0
        %v584 = vrot.slane %v583, 4
        %v585 = vadd.f32 %v583, %v584
        %v586 = vrot.slane %v585, 2
        %v587 = vadd.f32 %v585, %v586
        %v588 = vrot.slane %v587, 1
        %v589 = vadd.f32 %v587, %v588
        %v590 = vadd.f32 %v589, 1e-08
        %v591 = vrcp.pop %v590
        %v592 = vmul.f32 %v590, %v591
        %v593 = vsub.f32 1.0, %v592
        %v594 = vmul.f32 %v591, %v593
        %v595 = vadd.f32 %v591, %v594
        %vm596 = vweird.f32 %v590
        %vm597 = vweird.f32 %v591
        %vm598 = vmor %vm596, %vm597
        %v599 = vsel %vm598, %v591, %v595
        %v600 = vand.u32 2147483647, %v590
        %vm601 = vcmp.eq.f32.partialorder %v600, 8.507059e+37
        %v602 = vand.u32 %v590, 2147483648
        %v603 = vor.u32 1.1754944e-38, %v602
        %v604 = vsel %vm601, %v603, %v599
        %v605 = vmul.f32 1.0, %v604
        %606 = vxpose.xlu0.b32.start [1/16] %v605, 128
        %607 = vxpose.xlu0.b32.cont [2/16] 0.0, 128
        %608 = vxpose.xlu0.b32.cont [3/16] 0.0, 128
        %609 = vxpose.xlu0.b32.cont [4/16] 0.0, 128
        %610 = vxpose.xlu0.b32.cont [5/16] 0.0, 128
        %611 = vxpose.xlu0.b32.cont [6/16] 0.0, 128
        %612 = vxpose.xlu0.b32.cont [7/16] 0.0, 128
        %613 = vxpose.xlu0.b32.cont [8/16] 0.0, 128
        %614 = vxpose.xlu0.b32.cont [9/16] 0.0, 128
        %615 = vxpose.xlu0.b32.cont [10/16] 0.0, 128
        %616 = vxpose.xlu0.b32.cont [11/16] 0.0, 128
        %617 = vxpose.xlu0.b32.cont [12/16] 0.0, 128
        %618 = vxpose.xlu0.b32.cont [13/16] 0.0, 128
        %619 = vxpose.xlu0.b32.cont [14/16] 0.0, 128
        %620 = vxpose.xlu0.b32.cont [15/16] 0.0, 128
        %621 = vxpose.xlu0.b32.end [16/16] 0.0, 128
        %v622 = vpop.trf.xlu0
        %v623 = vpop.trf.xlu0
        %v624 = vpop.trf.xlu0
        %v625 = vpop.trf.xlu0
        %v626 = vpop.trf.xlu0
        %v627 = vpop.trf.xlu0
        %v628 = vpop.trf.xlu0
        %v629 = vpop.trf.xlu0
        %v630 = vpop.trf.xlu0
        %v631 = vpop.trf.xlu0
        %v632 = vpop.trf.xlu0
        %v633 = vpop.trf.xlu0
        %v634 = vpop.trf.xlu0
        %v635 = vpop.trf.xlu0
        %v636 = vpop.trf.xlu0
        %v637 = vpop.trf.xlu0
        %639 = vset.pattern.permute.xlu0 0
        %640 = vperm.xlu0 %639, %v622
        %v641 = vpop.permute.xlu0 %640
        %v643 = vmul.f32 %v425, %v641
        %645 = vrot.lane.b32.xlu0 %v643, 56
        %v646 = vpop.permute.xlu0 %645
        %v649 = vsel %vm186, %v582, 0
        %651 = vmatpush.msra.mxu0 0.0
        %652 = vmatpush.msra.mxu0 0.0
        %653 = vmatpush.msra.mxu0 0.0
        %654 = vmatpush.msra.mxu0 0.0
        %655 = vmatpush.msra.mxu0 0.0
        %656 = vmatpush.msra.mxu0 0.0
        %657 = vmatpush.msra.mxu0 0.0
        %658 = vmatpush.msra.mxu0 0.0
        %659 = vmatpush.msra.mxu0 0.0
        %660 = vmatpush.msra.mxu0 0.0
        %661 = vmatpush.msra.mxu0 0.0
        %662 = vmatpush.msra.mxu0 0.0
        %663 = vmatpush.msra.mxu0 0.0
        %664 = vmatpush.msra.mxu0 0.0
        %665 = vmatpush.msra.mxu0 0.0
        %666 = vmatpush.msra.mxu0 %v646
        %667 = vmatmul.f32.gmra.mxu0 %v649
        %v668 = vpop.f32.mrf.mxu0
        %v669 = vadd.f32 0.0, %v668
        %670 = vdwg.mxu0
        %672 = vrot.lane.b32.xlu0 %v669, 8
        %v673 = vpop.permute.xlu0 %672
        %vm675 = vcmask 130112
        %676 = vst.msk [vmem:[%s179] sm:$0xff] %vm675, %v673
        %v677 = vld [vmem:[%s175] sm:$0xff]
        %s678 = scalar_lea.vmem %s2, 16
        %v679 = vld [vmem:[%s678] sm:$0xff]
        %v680 = vmul.f32 %v677, 0.35355338
        %682 = vrot.lane.b32.xlu0 %v680, 112
        %v683 = vpop.permute.xlu0 %682
        %685 = vrot.lane.b32.xlu0 %v677, 80
        %v686 = vpop.permute.xlu0 %685
        %v687 = vsel %vm186, %v683, 0
        %v689 = vsel %vm186, %v686, 0
        %691 = vmatpush.xpose.msra.mxu0 0.0
        %692 = vmatpush.xpose.msra.mxu0 0.0
        %693 = vmatpush.xpose.msra.mxu0 0.0
        %694 = vmatpush.xpose.msra.mxu0 0.0
        %695 = vmatpush.xpose.msra.mxu0 0.0
        %696 = vmatpush.xpose.msra.mxu0 0.0
        %697 = vmatpush.xpose.msra.mxu0 0.0
        %698 = vmatpush.xpose.msra.mxu0 0.0
        %699 = vmatpush.xpose.msra.mxu0 0.0
        %700 = vmatpush.xpose.msra.mxu0 0.0
        %701 = vmatpush.xpose.msra.mxu0 0.0
        %702 = vmatpush.xpose.msra.mxu0 0.0
        %703 = vmatpush.xpose.msra.mxu0 0.0
        %704 = vmatpush.xpose.msra.mxu0 0.0
        %705 = vmatpush.xpose.msra.mxu0 0.0
        %706 = vmatpush.xpose.msra.mxu0 %v689
        %707 = vmatmul.f32.gmra.mxu0 %v687
        %v708 = vpop.f32.mrf.mxu0
        %v709 = vadd.f32 0.0, %v708
        %710 = vdwg.mxu0
        %711 = vrot.lane.b32.xlu0 %v677, 48
        %v712 = vpop.permute.xlu0 %711
        %v713 = vsel %vm186, %v712, 0
        %v716 = vsel %vm186, %v679, 0
        %718 = vmatpush.xpose.msra.mxu0 0.0
        %719 = vmatpush.xpose.msra.mxu0 0.0
        %720 = vmatpush.xpose.msra.mxu0 0.0
        %721 = vmatpush.xpose.msra.mxu0 0.0
        %722 = vmatpush.xpose.msra.mxu0 0.0
        %723 = vmatpush.xpose.msra.mxu0 0.0
        %724 = vmatpush.xpose.msra.mxu0 0.0
        %725 = vmatpush.xpose.msra.mxu0 0.0
        %726 = vmatpush.xpose.msra.mxu0 0.0
        %727 = vmatpush.xpose.msra.mxu0 0.0
        %728 = vmatpush.xpose.msra.mxu0 0.0
        %729 = vmatpush.xpose.msra.mxu0 0.0
        %730 = vmatpush.xpose.msra.mxu0 0.0
        %731 = vmatpush.xpose.msra.mxu0 0.0
        %732 = vmatpush.xpose.msra.mxu0 0.0
        %733 = vmatpush.xpose.msra.mxu0 %v716
        %734 = vmatmul.f32.gmra.mxu0 %v713
        %v735 = vpop.f32.mrf.mxu0
        %v736 = vadd.f32 0.0, %v735
        %737 = vdwg.mxu0
        %v738 = vmul.f32 %v736, 0.5
        %v739 = vmul.f32 %v736, 0.70710677
        %v740 = vmul.f32 %v739, %v739
        %v741 = vmin.f32 16.0, %v740
        %v742 = vmul.f32 %v741, 2.1237322e-06
        %v743 = vadd.f32 %v742, 0.00028619796
        %v744 = vmul.f32 %v741, %v743
        %v745 = vadd.f32 %v744, 0.0036580483
        %v746 = vmul.f32 %v741, %v745
        %v747 = vadd.f32 %v746, 0.05243302
        %v748 = vmul.f32 %v741, %v747
        %v749 = vadd.f32 %v748, 0.18741608
        %v750 = vmul.f32 %v741, %v749
        %v751 = vadd.f32 %v750, 1.1283791
        %v752 = vmul.f32 %v739, %v751
        %v753 = vmul.f32 %v741, 3.8918573e-05
        %v754 = vadd.f32 %v753, 0.001143296
        %v755 = vmul.f32 %v741, %v754
        %v756 = vadd.f32 %v755, 0.014752088
        %v757 = vmul.f32 %v741, %v756
        %v758 = vadd.f32 %v757, 0.112945676
        %v759 = vmul.f32 %v741, %v758
        %v760 = vadd.f32 %v759, 0.4994258
        %v761 = vmul.f32 %v741, %v760
        %v762 = vadd.f32 %v761, 1.0
        %v763 = vrcp.pop %v762
        %v764 = vmul.f32 %v762, %v763
        %v765 = vsub.f32 1.0, %v764
        %v766 = vmul.f32 %v763, %v765
        %v767 = vadd.f32 %v763, %v766
        %vm768 = vweird.f32 %v762
        %vm769 = vweird.f32 %v763
        %vm770 = vmor %vm768, %vm769
        %v771 = vsel %vm770, %v763, %v767
        %v772 = vand.u32 2147483647, %v762
        %vm773 = vcmp.eq.f32.partialorder %v772, 8.507059e+37
        %v774 = vand.u32 %v762, 2147483648
        %v775 = vor.u32 1.1754944e-38, %v774
        %v776 = vsel %vm773, %v775, %v771
        %v777 = vmul.f32 %v752, %v776
        %v778 = vmin.f32 %v777, 1.0
        %v779 = vmax.f32 %v778, -1.0
        %v780 = vadd.f32 %v779, 1.0
        %v781 = vmul.f32 %v738, %v780
        %v782 = vsel %vm186, %v781, -inf
        %783 = vmax.xlane.f32.xlu0 %v782
        %v784 = vpop.xlane.xlu0 %783
        %v785 = vsub.f32 %v781, %v784
        %v786 = vmul.f32 %v785, 1.442695
        %v787 = vpow.pop %v786
        %v788 = vsel %vm186, %v787, 0.0
        %789 = vadd.xlane.f32.xlu0 %v788
        %v790 = vpop.xlane.xlu0 %789
        %v791 = vrcp.pop %v790
        %v792 = vmul.f32 %v787, %v791
        %v794 = vsel %vm186, %v792, 0
        %796 = vmatpush.xpose.msra.mxu0 0.0
        %797 = vmatpush.xpose.msra.mxu0 0.0
        %798 = vmatpush.xpose.msra.mxu0 0.0
        %799 = vmatpush.xpose.msra.mxu0 0.0
        %800 = vmatpush.xpose.msra.mxu0 0.0
        %801 = vmatpush.xpose.msra.mxu0 0.0
        %802 = vmatpush.xpose.msra.mxu0 0.0
        %803 = vmatpush.xpose.msra.mxu0 0.0
        %804 = vmatpush.xpose.msra.mxu0 0.0
        %805 = vmatpush.xpose.msra.mxu0 0.0
        %806 = vmatpush.xpose.msra.mxu0 0.0
        %807 = vmatpush.xpose.msra.mxu0 0.0
        %808 = vmatpush.xpose.msra.mxu0 0.0
        %809 = vmatpush.xpose.msra.mxu0 0.0
        %810 = vmatpush.xpose.msra.mxu0 0.0
        %811 = vmatpush.xpose.msra.mxu0 %v794
        %812 = vmatmul.f32.gmra.mxu0 %v794
        %v813 = vpop.f32.mrf.mxu0
        %v814 = vadd.f32 0.0, %v813
        %815 = vdwg.mxu0
        %v816 = vmul.f32 %v709, %v814
        %v817 = vsel %vm186, %v816, -inf
        %818 = vmax.xlane.f32.xlu0 %v817
        %v819 = vpop.xlane.xlu0 %818
        %v820 = vsub.f32 %v816, %v819
        %v821 = vmul.f32 %v820, 1.442695
        %v822 = vpow.pop %v821
        %v823 = vsel %vm186, %v822, 0.0
        %824 = vadd.xlane.f32.xlu0 %v823
        %v825 = vpop.xlane.xlu0 %824
        %s826 = sld [smem:[#allocation2 + $0x2]]
        %s827 = ssub.f32 1.0, %s826
        %v828 = vrcp.pop %v825
        %v829 = vstv %s827
        %v830 = vmul.f32 %v829, %v828
        %v831 = vmul.f32 %v822, %v830
        %v832 = vstv %s826
        %v833 = vmul.f32 %v832, %v814
        %v834 = vadd.f32 %v831, %v833
        %v835 = vsel %vm186, %v834, 0.0
        %v836 = vrot.slane %v835, 4
        %v837 = vadd.f32 %v835, %v836
        %v838 = vrot.slane %v837, 2
        %v839 = vadd.f32 %v837, %v838
        %v840 = vrot.slane %v839, 1
        %v841 = vadd.f32 %v839, %v840
        %v842 = vadd.f32 %v841, 1e-08
        %v843 = vrcp.pop %v842
        %v844 = vmul.f32 %v842, %v843
        %v845 = vsub.f32 1.0, %v844
        %v846 = vmul.f32 %v843, %v845
        %v847 = vadd.f32 %v843, %v846
        %vm848 = vweird.f32 %v842
        %vm849 = vweird.f32 %v843
        %vm850 = vmor %vm848, %vm849
        %v851 = vsel %vm850, %v843, %v847
        %v852 = vand.u32 2147483647, %v842
        %vm853 = vcmp.eq.f32.partialorder %v852, 8.507059e+37
        %v854 = vand.u32 %v842, 2147483648
        %v855 = vor.u32 1.1754944e-38, %v854
        %v856 = vsel %vm853, %v855, %v851
        %v857 = vmul.f32 1.0, %v856
        %858 = vxpose.xlu0.b32.start [1/16] %v857, 128
        %859 = vxpose.xlu0.b32.cont [2/16] 0.0, 128
        %860 = vxpose.xlu0.b32.cont [3/16] 0.0, 128
        %861 = vxpose.xlu0.b32.cont [4/16] 0.0, 128
        %862 = vxpose.xlu0.b32.cont [5/16] 0.0, 128
        %863 = vxpose.xlu0.b32.cont [6/16] 0.0, 128
        %864 = vxpose.xlu0.b32.cont [7/16] 0.0, 128
        %865 = vxpose.xlu0.b32.cont [8/16] 0.0, 128
        %866 = vxpose.xlu0.b32.cont [9/16] 0.0, 128
        %867 = vxpose.xlu0.b32.cont [10/16] 0.0, 128
        %868 = vxpose.xlu0.b32.cont [11/16] 0.0, 128
        %869 = vxpose.xlu0.b32.cont [12/16] 0.0, 128
        %870 = vxpose.xlu0.b32.cont [13/16] 0.0, 128
        %871 = vxpose.xlu0.b32.cont [14/16] 0.0, 128
        %872 = vxpose.xlu0.b32.cont [15/16] 0.0, 128
        %873 = vxpose.xlu0.b32.end [16/16] 0.0, 128
        %v874 = vpop.trf.xlu0
        %v875 = vpop.trf.xlu0
        %v876 = vpop.trf.xlu0
        %v877 = vpop.trf.xlu0
        %v878 = vpop.trf.xlu0
        %v879 = vpop.trf.xlu0
        %v880 = vpop.trf.xlu0
        %v881 = vpop.trf.xlu0
        %v882 = vpop.trf.xlu0
        %v883 = vpop.trf.xlu0
        %v884 = vpop.trf.xlu0
        %v885 = vpop.trf.xlu0
        %v886 = vpop.trf.xlu0
        %v887 = vpop.trf.xlu0
        %v888 = vpop.trf.xlu0
        %v889 = vpop.trf.xlu0
        %891 = vset.pattern.permute.xlu0 0
        %892 = vperm.xlu0 %891, %v874
        %v893 = vpop.permute.xlu0 %892
        %v895 = vmul.f32 %v677, %v893
        %897 = vrot.lane.b32.xlu0 %v895, 48
        %v898 = vpop.permute.xlu0 %897
        %v901 = vsel %vm186, %v834, 0
        %903 = vmatpush.msra.mxu0 0.0
        %904 = vmatpush.msra.mxu0 0.0
        %905 = vmatpush.msra.mxu0 0.0
        %906 = vmatpush.msra.mxu0 0.0
        %907 = vmatpush.msra.mxu0 0.0
        %908 = vmatpush.msra.mxu0 0.0
        %909 = vmatpush.msra.mxu0 0.0
        %910 = vmatpush.msra.mxu0 0.0
        %911 = vmatpush.msra.mxu0 0.0
        %912 = vmatpush.msra.mxu0 0.0
        %913 = vmatpush.msra.mxu0 0.0
        %914 = vmatpush.msra.mxu0 0.0
        %915 = vmatpush.msra.mxu0 0.0
        %916 = vmatpush.msra.mxu0 0.0
        %917 = vmatpush.msra.mxu0 0.0
        %918 = vmatpush.msra.mxu0 %v898
        %919 = vmatmul.f32.gmra.mxu0 %v901
        %v920 = vpop.f32.mrf.mxu0
        %v921 = vadd.f32 0.0, %v920
        %922 = vdwg.mxu0
        %924 = vrot.lane.b32.xlu0 %v921, 16
        %v925 = vpop.permute.xlu0 %924
        %vm927 = vcmask 195712
        %928 = vst.msk [vmem:[%s179] sm:$0xff] %vm927, %v925
        %v929 = vld [vmem:[%s175] sm:$0xff]
        %s930 = scalar_lea.vmem %s2, 24
        %v931 = vld [vmem:[%s930] sm:$0xff]
        %v932 = vmul.f32 %v929, 0.35355338
        %934 = vrot.lane.b32.xlu0 %v932, 104
        %v935 = vpop.permute.xlu0 %934
        %937 = vrot.lane.b32.xlu0 %v929, 72
        %v938 = vpop.permute.xlu0 %937
        %v939 = vsel %vm186, %v935, 0
        %v941 = vsel %vm186, %v938, 0
        %943 = vmatpush.xpose.msra.mxu0 0.0
        %944 = vmatpush.xpose.msra.mxu0 0.0
        %945 = vmatpush.xpose.msra.mxu0 0.0
        %946 = vmatpush.xpose.msra.mxu0 0.0
        %947 = vmatpush.xpose.msra.mxu0 0.0
        %948 = vmatpush.xpose.msra.mxu0 0.0
        %949 = vmatpush.xpose.msra.mxu0 0.0
        %950 = vmatpush.xpose.msra.mxu0 0.0
        %951 = vmatpush.xpose.msra.mxu0 0.0
        %952 = vmatpush.xpose.msra.mxu0 0.0
        %953 = vmatpush.xpose.msra.mxu0 0.0
        %954 = vmatpush.xpose.msra.mxu0 0.0
        %955 = vmatpush.xpose.msra.mxu0 0.0
        %956 = vmatpush.xpose.msra.mxu0 0.0
        %957 = vmatpush.xpose.msra.mxu0 0.0
        %958 = vmatpush.xpose.msra.mxu0 %v941
        %959 = vmatmul.f32.gmra.mxu0 %v939
        %v960 = vpop.f32.mrf.mxu0
        %v961 = vadd.f32 0.0, %v960
        %962 = vdwg.mxu0
        %963 = vrot.lane.b32.xlu0 %v929, 40
        %v964 = vpop.permute.xlu0 %963
        %v965 = vsel %vm186, %v964, 0
        %v968 = vsel %vm186, %v931, 0
        %970 = vmatpush.xpose.msra.mxu0 0.0
        %971 = vmatpush.xpose.msra.mxu0 0.0
        %972 = vmatpush.xpose.msra.mxu0 0.0
        %973 = vmatpush.xpose.msra.mxu0 0.0
        %974 = vmatpush.xpose.msra.mxu0 0.0
        %975 = vmatpush.xpose.msra.mxu0 0.0
        %976 = vmatpush.xpose.msra.mxu0 0.0
        %977 = vmatpush.xpose.msra.mxu0 0.0
        %978 = vmatpush.xpose.msra.mxu0 0.0
        %979 = vmatpush.xpose.msra.mxu0 0.0
        %980 = vmatpush.xpose.msra.mxu0 0.0
        %981 = vmatpush.xpose.msra.mxu0 0.0
        %982 = vmatpush.xpose.msra.mxu0 0.0
        %983 = vmatpush.xpose.msra.mxu0 0.0
        %984 = vmatpush.xpose.msra.mxu0 0.0
        %985 = vmatpush.xpose.msra.mxu0 %v968
        %986 = vmatmul.f32.gmra.mxu0 %v965
        %v987 = vpop.f32.mrf.mxu0
        %v988 = vadd.f32 0.0, %v987
        %989 = vdwg.mxu0
        %v990 = vmul.f32 %v988, 0.5
        %v991 = vmul.f32 %v988, 0.70710677
        %v992 = vmul.f32 %v991, %v991
        %v993 = vmin.f32 16.0, %v992
        %v994 = vmul.f32 %v993, 2.1237322e-06
        %v995 = vadd.f32 %v994, 0.00028619796
        %v996 = vmul.f32 %v993, %v995
        %v997 = vadd.f32 %v996, 0.0036580483
        %v998 = vmul.f32 %v993, %v997
        %v999 = vadd.f32 %v998, 0.05243302
        %v1000 = vmul.f32 %v993, %v999
        %v1001 = vadd.f32 %v1000, 0.18741608
        %v1002 = vmul.f32 %v993, %v1001
        %v1003 = vadd.f32 %v1002, 1.1283791
        %v1004 = vmul.f32 %v991, %v1003
        %v1005 = vmul.f32 %v993, 3.8918573e-05
        %v1006 = vadd.f32 %v1005, 0.001143296
        %v1007 = vmul.f32 %v993, %v1006
        %v1008 = vadd.f32 %v1007, 0.014752088
        %v1009 = vmul.f32 %v993, %v1008
        %v1010 = vadd.f32 %v1009, 0.112945676
        %v1011 = vmul.f32 %v993, %v1010
        %v1012 = vadd.f32 %v1011, 0.4994258
        %v1013 = vmul.f32 %v993, %v1012
        %v1014 = vadd.f32 %v1013, 1.0
        %v1015 = vrcp.pop %v1014
        %v1016 = vmul.f32 %v1014, %v1015
        %v1017 = vsub.f32 1.0, %v1016
        %v1018 = vmul.f32 %v1015, %v1017
        %v1019 = vadd.f32 %v1015, %v1018
        %vm1020 = vweird.f32 %v1014
        %vm1021 = vweird.f32 %v1015
        %vm1022 = vmor %vm1020, %vm1021
        %v1023 = vsel %vm1022, %v1015, %v1019
        %v1024 = vand.u32 2147483647, %v1014
        %vm1025 = vcmp.eq.f32.partialorder %v1024, 8.507059e+37
        %v1026 = vand.u32 %v1014, 2147483648
        %v1027 = vor.u32 1.1754944e-38, %v1026
        %v1028 = vsel %vm1025, %v1027, %v1023
        %v1029 = vmul.f32 %v1004, %v1028
        %v1030 = vmin.f32 %v1029, 1.0
        %v1031 = vmax.f32 %v1030, -1.0
        %v1032 = vadd.f32 %v1031, 1.0
        %v1033 = vmul.f32 %v990, %v1032
        %v1034 = vsel %vm186, %v1033, -inf
        %1035 = vmax.xlane.f32.xlu0 %v1034
        %v1036 = vpop.xlane.xlu0 %1035
        %v1037 = vsub.f32 %v1033, %v1036
        %v1038 = vmul.f32 %v1037, 1.442695
        %v1039 = vpow.pop %v1038
        %v1040 = vsel %vm186, %v1039, 0.0
        %1041 = vadd.xlane.f32.xlu0 %v1040
        %v1042 = vpop.xlane.xlu0 %1041
        %v1043 = vrcp.pop %v1042
        %v1044 = vmul.f32 %v1039, %v1043
        %v1046 = vsel %vm186, %v1044, 0
        %1048 = vmatpush.xpose.msra.mxu0 0.0
        %1049 = vmatpush.xpose.msra.mxu0 0.0
        %1050 = vmatpush.xpose.msra.mxu0 0.0
        %1051 = vmatpush.xpose.msra.mxu0 0.0
        %1052 = vmatpush.xpose.msra.mxu0 0.0
        %1053 = vmatpush.xpose.msra.mxu0 0.0
        %1054 = vmatpush.xpose.msra.mxu0 0.0
        %1055 = vmatpush.xpose.msra.mxu0 0.0
        %1056 = vmatpush.xpose.msra.mxu0 0.0
        %1057 = vmatpush.xpose.msra.mxu0 0.0
        %1058 = vmatpush.xpose.msra.mxu0 0.0
        %1059 = vmatpush.xpose.msra.mxu0 0.0
        %1060 = vmatpush.xpose.msra.mxu0 0.0
        %1061 = vmatpush.xpose.msra.mxu0 0.0
        %1062 = vmatpush.xpose.msra.mxu0 0.0
        %1063 = vmatpush.xpose.msra.mxu0 %v1046
        %1064 = vmatmul.f32.gmra.mxu0 %v1046
        %v1065 = vpop.f32.mrf.mxu0
        %v1066 = vadd.f32 0.0, %v1065
        %1067 = vdwg.mxu0
        %v1068 = vmul.f32 %v961, %v1066
        %v1069 = vsel %vm186, %v1068, -inf
        %1070 = vmax.xlane.f32.xlu0 %v1069
        %v1071 = vpop.xlane.xlu0 %1070
        %v1072 = vsub.f32 %v1068, %v1071
        %v1073 = vmul.f32 %v1072, 1.442695
        %v1074 = vpow.pop %v1073
        %v1075 = vsel %vm186, %v1074, 0.0
        %1076 = vadd.xlane.f32.xlu0 %v1075
        %v1077 = vpop.xlane.xlu0 %1076
        %s1078 = sld [smem:[#allocation2 + $0x3]]
        %s1079 = ssub.f32 1.0, %s1078
        %v1080 = vrcp.pop %v1077
        %v1081 = vstv %s1079
        %v1082 = vmul.f32 %v1081, %v1080
        %v1083 = vmul.f32 %v1074, %v1082
        %v1084 = vstv %s1078
        %v1085 = vmul.f32 %v1084, %v1066
        %v1086 = vadd.f32 %v1083, %v1085
        %v1087 = vsel %vm186, %v1086, 0.0
        %v1088 = vrot.slane %v1087, 4
        %v1089 = vadd.f32 %v1087, %v1088
        %v1090 = vrot.slane %v1089, 2
        %v1091 = vadd.f32 %v1089, %v1090
        %v1092 = vrot.slane %v1091, 1
        %v1093 = vadd.f32 %v1091, %v1092
        %v1094 = vadd.f32 %v1093, 1e-08
        %v1095 = vrcp.pop %v1094
        %v1096 = vmul.f32 %v1094, %v1095
        %v1097 = vsub.f32 1.0, %v1096
        %v1098 = vmul.f32 %v1095, %v1097
        %v1099 = vadd.f32 %v1095, %v1098
        %vm1100 = vweird.f32 %v1094
        %vm1101 = vweird.f32 %v1095
        %vm1102 = vmor %vm1100, %vm1101
        %v1103 = vsel %vm1102, %v1095, %v1099
        %v1104 = vand.u32 2147483647, %v1094
        %vm1105 = vcmp.eq.f32.partialorder %v1104, 8.507059e+37
        %v1106 = vand.u32 %v1094, 2147483648
        %v1107 = vor.u32 1.1754944e-38, %v1106
        %v1108 = vsel %vm1105, %v1107, %v1103
        %v1109 = vmul.f32 1.0, %v1108
        %1110 = vxpose.xlu0.b32.start [1/16] %v1109, 128
        %1111 = vxpose.xlu0.b32.cont [2/16] 0.0, 128
        %1112 = vxpose.xlu0.b32.cont [3/16] 0.0, 128
        %1113 = vxpose.xlu0.b32.cont [4/16] 0.0, 128
        %1114 = vxpose.xlu0.b32.cont [5/16] 0.0, 128
        %1115 = vxpose.xlu0.b32.cont [6/16] 0.0, 128
        %1116 = vxpose.xlu0.b32.cont [7/16] 0.0, 128
        %1117 = vxpose.xlu0.b32.cont [8/16] 0.0, 128
        %1118 = vxpose.xlu0.b32.cont [9/16] 0.0, 128
        %1119 = vxpose.xlu0.b32.cont [10/16] 0.0, 128
        %1120 = vxpose.xlu0.b32.cont [11/16] 0.0, 128
        %1121 = vxpose.xlu0.b32.cont [12/16] 0.0, 128
        %1122 = vxpose.xlu0.b32.cont [13/16] 0.0, 128
        %1123 = vxpose.xlu0.b32.cont [14/16] 0.0, 128
        %1124 = vxpose.xlu0.b32.cont [15/16] 0.0, 128
        %1125 = vxpose.xlu0.b32.end [16/16] 0.0, 128
        %v1126 = vpop.trf.xlu0
        %v1127 = vpop.trf.xlu0
        %v1128 = vpop.trf.xlu0
        %v1129 = vpop.trf.xlu0
        %v1130 = vpop.trf.xlu0
        %v1131 = vpop.trf.xlu0
        %v1132 = vpop.trf.xlu0
        %v1133 = vpop.trf.xlu0
        %v1134 = vpop.trf.xlu0
        %v1135 = vpop.trf.xlu0
        %v1136 = vpop.trf.xlu0
        %v1137 = vpop.trf.xlu0
        %v1138 = vpop.trf.xlu0
        %v1139 = vpop.trf.xlu0
        %v1140 = vpop.trf.xlu0
        %v1141 = vpop.trf.xlu0
        %1143 = vset.pattern.permute.xlu0 0
        %1144 = vperm.xlu0 %1143, %v1126
        %v1145 = vpop.permute.xlu0 %1144
        %v1147 = vmul.f32 %v929, %v1145
        %1149 = vrot.lane.b32.xlu0 %v1147, 40
        %v1150 = vpop.permute.xlu0 %1149
        %v1153 = vsel %vm186, %v1086, 0
        %1155 = vmatpush.msra.mxu0 0.0
        %1156 = vmatpush.msra.mxu0 0.0
        %1157 = vmatpush.msra.mxu0 0.0
        %1158 = vmatpush.msra.mxu0 0.0
        %1159 = vmatpush.msra.mxu0 0.0
        %1160 = vmatpush.msra.mxu0 0.0
        %1161 = vmatpush.msra.mxu0 0.0
        %1162 = vmatpush.msra.mxu0 0.0
        %1163 = vmatpush.msra.mxu0 0.0
        %1164 = vmatpush.msra.mxu0 0.0
        %1165 = vmatpush.msra.mxu0 0.0
        %1166 = vmatpush.msra.mxu0 0.0
        %1167 = vmatpush.msra.mxu0 0.0
        %1168 = vmatpush.msra.mxu0 0.0
        %1169 = vmatpush.msra.mxu0 0.0
        %1170 = vmatpush.msra.mxu0 %v1150
        %1171 = vmatmul.f32.gmra.mxu0 %v1153
        %v1172 = vpop.f32.mrf.mxu0
        %v1173 = vadd.f32 0.0, %v1172
        %1174 = vdwg.mxu0
        %1176 = vrot.lane.b32.xlu0 %v1173, 24
        %v1177 = vpop.permute.xlu0 %1176
        %vm1179 = vcmask 261312
        %1180 = vst.msk [vmem:[%s179] sm:$0xff] %vm1179, %v1177
        %p1181 = scmp.lt.s32.totalorder %s15, 1
        %s1182 = scalar_select %p1181, %s15, 1
        %s1183 = smul.addr %s1182, 8
        %s1184 = scalar_lea.vmem %s3, %s1183
        // Predicated region
        $region37: #{multi_head_attention.4} parent=31 // pred_check
          %p1185 = pneg %p101
        $region38: #{multi_head_attention.4} parent=31 // pred_check_branch
          %1187 = sbr.rel (%p1185) target = $region40
        $region39: #{multi_head_attention.4} parent=31 // pred_region
          _
        $region40: #{multi_head_attention.4} parent=31 // pred_fallthru
          _
      $region32: #{multi_head_attention.4} parent=5 // pred_fallthru
        _
      %p1188 = scmp.le.s32.totalorder 2, %s10
      // Predicated region
      $region41: #{multi_head_attention.4} parent=5 // pred_check
        %p1189 = pneg %p1188
      $region42: #{multi_head_attention.4} parent=5 // pred_check_branch
        %1191 = sbr.rel (%p1189) target = $region44
      $region43: #{multi_head_attention.4} parent=5 // pred_region
        %s1192 = ssub.s32 %s10, 2
        // Predicated region
        $region45: #{multi_head_attention.4} parent=43 // pred_check
          %p1193 = pneg %p107
        $region46: #{multi_head_attention.4} parent=43 // pred_check_branch
          %1195 = sbr.rel (%p1193) target = $region48
        $region47: #{multi_head_attention.4} parent=43 // pred_region
          %p1196 = scmp.lt.s32.totalorder %s16, 1
          %s1197 = scalar_select %p1196, %s16, 1
          %s1198 = smul.addr %s1197, 8
          %s1199 = scalar_lea.vmem %s3, %s1198
        $region48: #{multi_head_attention.4} parent=43 // pred_fallthru
          _
      $region44: #{multi_head_attention.4} parent=5 // pred_fallthru
        _
    $region6: #{multi_head_attention.4} parent=1 // loop_footer
      %s14 = sadd.s32 1, %s10
    $region7: #{multi_head_attention.4} parent=1 // loop_footer_branch
      %9 = sbr.rel target = $region3
    $region8: #{multi_head_attention.4} parent=1 // loop_exit
      _
    %1200 = vsyncpa [#allocation3], 1
    %s1201 = scalar_lea.sflag [#allocation3], 1
    %1202 = vsyncpa %s1201, 1

</llo_original>
